<compile_context>
chip_gen: v5e
topology: v5e:2x2
jax: 0.10.0
libtpu: 0.0.40
codegen_flags: <defaults>
</compile_context>

<pallas_src>
import functools

import jax
import jax.numpy as jnp
from jax.experimental import pallas as pl
from jax.experimental.pallas import tpu as pltpu


# ---------------------------------------------------------------------------
# Kernels
# ---------------------------------------------------------------------------

def _select_and_project(score, cb_out_ref, y_ref, idx_ref, lookup_precision):
    """Shared tail: exact first-occurrence argmax over K + fused embed/out_proj."""
    K = score.shape[0]
    k_iota = jax.lax.broadcasted_iota(jnp.int32, score.shape, 0)            # (K, TM)
    # Exact first-occurrence argmax (matches jnp.argmax; torch's tie order is
    # backend-dependent).  Written as max -> masked-iota -> min because a
    # variadic argmax reduce is not reliably lowered by Mosaic; the reduces run
    # on the XLU, the select on the VPU.
    max_s = jnp.max(score, axis=0, keepdims=True)                            # (1, TM)
    idx = jnp.min(jnp.where(score == max_s, k_iota, K), axis=0, keepdims=True)
    idx = jnp.minimum(idx, K - 1)        # all-NaN column guard: stay in range
    idx_ref[0] = idx.astype(jnp.int32)

    # Embedding lookup + out_proj as one one-hot matmul against the fused
    # (codebook @ W_out + b_out)^T table.  One-hot columns are exact in bf16, so
    # a bf16 table at DEFAULT precision keeps the selection exact and only
    # rounds the output values.
    # TODO(synk): for K >= ~4096 chunk K here (running max/argmax + per-chunk
    # masked accumulate) to bound the (K, TM) temporaries on v7x's 64 MiB VMEM.
    onehot = (k_iota == idx).astype(cb_out_ref.dtype)                        # (K, TM)
    y = jnp.dot(cb_out_ref[...], onehot, preferred_element_type=jnp.float32,
                precision=lookup_precision)                                  # (Din, TM)
    y_ref[0] = y.astype(y_ref.dtype)


def _vq_kernel_folded(x_ref, w_s_ref, b_s_ref, cb_out_ref, y_ref, idx_ref,
                      *, lookup_precision):
    # x_ref:      (1, Din, TM)  token tile in native (B, Din, T) layout
    # w_s_ref:    (K, Din)      cb_n @ W_in^T  (in_proj folded into score table)
    # b_s_ref:    (K, 1)        cb_n @ b_in
    # cb_out_ref: (Din, K)      (codebook @ W_out + b_out)^T  (out_proj folded)
    x = x_ref[0]                                                             # (Din, TM)
    score = jnp.dot(w_s_ref[...], x, preferred_element_type=jnp.float32,
                    precision=jax.lax.Precision.HIGHEST) + b_s_ref[...]      # (K, TM)
    _select_and_project(score, cb_out_ref, y_ref, idx_ref, lookup_precision)


def _vq_kernel_generic(x_ref, w_in_ref, b_in_ref, cb_n_ref, cb_out_ref, y_ref,
                       idx_ref, *, lookup_precision):
    # Un-folded variant for large input_dim (folding would multiply score passes).
    x = x_ref[0]                                                             # (Din, TM)
    z_e = jnp.dot(w_in_ref[...], x, preferred_element_type=jnp.float32,
                  precision=jax.lax.Precision.HIGHEST) + b_in_ref[...]       # (Dc, TM)
    # argmin ||e_n - c_n||^2 == argmax (z_e . c_n) for unit-norm codebook rows.
    score = jnp.dot(cb_n_ref[...], z_e, preferred_element_type=jnp.float32,
                    precision=jax.lax.Precision.HIGHEST)                     # (K, TM)
    _select_and_project(score, cb_out_ref, y_ref, idx_ref, lookup_precision)


# ---------------------------------------------------------------------------
# Generation-aware VMEM / tile budgeting
# ---------------------------------------------------------------------------

def _round_up(v, m):
    return -(-v // m) * m


def _tile_bytes(rows, cols, itemsize):
    # VMEM tiles pad the sublane axis to 8 and the lane axis to 128.
    return _round_up(max(rows, 1), 8) * _round_up(max(cols, 1), 128) * itemsize


def _estimate_vmem_bytes(Din, Dc, K, TM, table_itemsize, folded):
    est = 2 * _tile_bytes(Din, TM, 4)                      # x tile (double buffered)
    est += 2 * _tile_bytes(Din, TM, 4)                     # y tile
    est += 2 * _tile_bytes(1, TM, 4)                       # idx tile
    if folded:
        est += 2 * (_tile_bytes(K, Din, 4) + _tile_bytes(K, 1, 4))
    else:
        est += 2 * (_tile_bytes(Dc, Din, 4) + _tile_bytes(Dc, 1, 4)
                    + _tile_bytes(K, Dc, 4))
        est += _tile_bytes(Dc, TM, 4)                      # z_e temporary
    est += 2 * _tile_bytes(Din, K, table_itemsize)         # fused output codebook
    est += 2 * _tile_bytes(K, TM, 4)                       # score + iota temporaries
    est += _tile_bytes(K, TM, table_itemsize)              # one-hot temporary
    return est


def _pick_budget(token_tile, vmem_limit_bytes, est_fn):
    try:
        info = pltpu.get_tpu_info()
        phys = int(getattr(info, "vmem_capacity_bytes", 0) or 0)
    except Exception:
        phys = 0
    if phys <= 0:
        phys = 64 * 1024 * 1024                            # conservative: v7x per-TC VMEM
    if token_tile is None:
        # 512-token tiles on 128-MiB parts (v5e/v6e), 256 on 64-MiB parts (v7x).
        token_tile = 512 if phys >= 128 * 1024 * 1024 else 256
    if vmem_limit_bytes is None:
        est = est_fn(token_tile)
        vmem_limit_bytes = min(max(2 * est, 32 * 1024 * 1024), phys * 3 // 4)
    return token_tile, int(vmem_limit_bytes)


# ---------------------------------------------------------------------------
# Wrapper
# ---------------------------------------------------------------------------

def vq_forward_pallas(z, params, *, stride=1, table_dtype=jnp.bfloat16,
                      fold_in_proj=None, token_tile=None, vmem_limit_bytes=None):
    """z: (B, input_dim, T) f32.  Returns (z_q: (B, input_dim, T'), indices: (B, T''))."""
    w_in, b_in, w_out, b_out, codebook = (
        params["w_in"], params["b_in"], params["w_out"], params["b_out"],
        params["codebook"])

    if stride > 1:                                         # avg_pool1d(stride, stride)
        B0, C0, T0 = z.shape
        Tt = (T0 // stride) * stride
        z = z[:, :, :Tt].reshape(B0, C0, Tt // stride, stride).mean(axis=-1)

    B, Din, T = z.shape
    K, Dc = codebook.shape

    folded = (Din <= 128) if fold_in_proj is None else bool(fold_in_proj)
    table_dtype = jnp.dtype(table_dtype)
    lookup_precision = (jax.lax.Precision.HIGHEST
                        if table_dtype == jnp.dtype(jnp.float32)
                        else jax.lax.Precision.DEFAULT)

    TM, vmem_limit = _pick_budget(
        token_tile, vmem_limit_bytes,
        lambda tm: _estimate_vmem_bytes(Din, Dc, K, tm, table_dtype.itemsize, folded))
    assert TM % 128 == 0, "token tile must be lane aligned"

    # Constant tables, computed once in the wrapper (the grid is a sequential
    # per-TensorCore loop, so anything left in the kernel is redone per tile).
    hi = jax.lax.Precision.HIGHEST
    cb_n = codebook / jnp.maximum(
        jnp.sqrt(jnp.sum(codebook * codebook, axis=-1, keepdims=True)), 1e-12)
    cb_out = jnp.transpose(
        jnp.dot(codebook, w_out, precision=hi) + b_out).astype(table_dtype)   # (Din, K)
    w_in_t = jnp.transpose(w_in).astype(jnp.float32)                           # (Dc, Din)
    b_in_col = jnp.reshape(b_in, (Dc, 1)).astype(jnp.float32)                  # (Dc, 1)

    if folded:
        w_s = jnp.dot(cb_n, w_in_t, precision=hi).astype(jnp.float32)          # (K, Din)
        b_s = jnp.dot(cb_n, b_in_col, precision=hi).astype(jnp.float32)        # (K, 1)
        tables = (w_s, b_s, cb_out)
        table_specs = [pl.BlockSpec((K, Din), lambda b, i: (0, 0)),
                       pl.BlockSpec((K, 1), lambda b, i: (0, 0)),
                       pl.BlockSpec((Din, K), lambda b, i: (0, 0))]
        kernel = functools.partial(_vq_kernel_folded,
                                   lookup_precision=lookup_precision)
    else:
        tables = (w_in_t, b_in_col, cb_n.astype(jnp.float32), cb_out)
        table_specs = [pl.BlockSpec((Dc, Din), lambda b, i: (0, 0)),
                       pl.BlockSpec((Dc, 1), lambda b, i: (0, 0)),
                       pl.BlockSpec((K, Dc), lambda b, i: (0, 0)),
                       pl.BlockSpec((Din, K), lambda b, i: (0, 0))]
        kernel = functools.partial(_vq_kernel_generic,
                                   lookup_precision=lookup_precision)

    # Native-layout token grid: (batch, token tiles).  Pad only along T.
    G = -(-T // TM)
    T_pad = G * TM
    x = z if T_pad == T else jnp.pad(z, ((0, 0), (0, 0), (0, T_pad - T)))

    y_pad, idx_pad = pl.pallas_call(
        kernel,
        out_shape=(jax.ShapeDtypeStruct((B, Din, T_pad), z.dtype),
                   jax.ShapeDtypeStruct((B, 1, T_pad), jnp.int32)),
        grid=(B, G),
        in_specs=[pl.BlockSpec((1, Din, TM), lambda b, i: (b, 0, i)),
                  *table_specs],
        out_specs=(pl.BlockSpec((1, Din, TM), lambda b, i: (b, 0, i)),
                   pl.BlockSpec((1, 1, TM), lambda b, i: (b, 0, i))),
        compiler_params=pltpu.CompilerParams(
            dimension_semantics=("parallel", "parallel"),
            vmem_limit_bytes=vmem_limit),
    )(x, *tables)

    y = y_pad if T_pad == T else y_pad[:, :, :T]
    indices = idx_pad[:, 0, :T]

    if stride > 1:
        y = jnp.repeat(y, stride, axis=-1)                 # repeat_interleave
    return y, indices


# ---------------------------------------------------------------------------
# Pure-JAX reference mirroring the PyTorch forward
# ---------------------------------------------------------------------------

def vq_forward_ref(z, params, *, stride=1):
    w_in, b_in, w_out, b_out, codebook = (
        params["w_in"], params["b_in"], params["w_out"], params["b_out"],
        params["codebook"])
    if stride > 1:
        B, C, T0 = z.shape
        Tt = (T0 // stride) * stride
        z = z[:, :, :Tt].reshape(B, C, Tt // stride, stride).mean(axis=-1)
    B, Din, T = z.shape
    x = jnp.transpose(z, (0, 2, 1)).reshape(B * T, Din)
    z_e = x @ w_in + b_in[0]
    e_n = z_e / jnp.maximum(jnp.linalg.norm(z_e, axis=-1, keepdims=True), 1e-12)
    c_n = codebook / jnp.maximum(jnp.linalg.norm(codebook, axis=-1, keepdims=True), 1e-12)
    dist = (jnp.sum(e_n**2, -1, keepdims=True) - 2 * e_n @ c_n.T
            + jnp.sum(c_n**2, -1, keepdims=True).T)
    idx = jnp.argmax(-dist, axis=-1)
    z_q = codebook[idx]
    y = z_q @ w_out + b_out[0]
    y = jnp.transpose(y.reshape(B, T, Din), (0, 2, 1))
    if stride > 1:
        y = jnp.repeat(y, stride, axis=-1)
    return y, idx.reshape(B, T).astype(jnp.int32)


def make_params(key, input_dim, codebook_size, codebook_dim):
    k1, k2, k3, k4, k5 = jax.random.split(key, 5)
    # Conv1d(k=1) weights stored as (in, out) for the reference matmuls.
    w_in = jax.random.normal(k1, (input_dim, codebook_dim), jnp.float32) * 0.1
    b_in = jax.random.normal(k2, (1, codebook_dim), jnp.float32) * 0.01
    w_out = jax.random.normal(k3, (codebook_dim, input_dim), jnp.float32) * 0.1
    b_out = jax.random.normal(k4, (1, input_dim), jnp.float32) * 0.01
    codebook = jax.random.normal(k5, (codebook_size, codebook_dim), jnp.float32)
    return dict(w_in=w_in, b_in=b_in, w_out=w_out, b_out=b_out, codebook=codebook)


if __name__ == "__main__":
    # Global 'highest' keeps the JAX reference's f32 matmuls exact so the
    # kernel's (explicitly HIGHEST) argmax path matches it bit-for-bit.
    jax.config.update("jax_default_matmul_precision", "highest")

    key = jax.random.PRNGKey(0)
    B, input_dim, T = 2, 32, 200            # 200 tokens/batch -> padded token tiles
    codebook_size, codebook_dim = 128, 16

    kz, kp = jax.random.split(key)
    z = jax.random.normal(kz, (B, input_dim, T), jnp.float32)
    params = make_params(kp, input_dim, codebook_size, codebook_dim)

    # 1) Default config: folded in_proj (Din=32 <= 128), bf16 lookup table.
    #    Indices are exact (f32/HIGHEST score path); values carry bf16 rounding.
    z_q, indices = vq_forward_pallas(z, params, stride=1)
    jax.block_until_ready((z_q, indices))
    z_q_ref, idx_ref = vq_forward_ref(z, params, stride=1)
    assert z_q.shape == (B, input_dim, T) and indices.shape == (B, T)
    assert jnp.array_equal(indices, idx_ref)
    assert jnp.allclose(z_q, z_q_ref, atol=3e-2, rtol=3e-2)

    # 2) Exact mode + generic (un-folded) kernel + stride=2 pooling glue.
    z_q2, indices2 = vq_forward_pallas(z, params, stride=2,
                                       table_dtype=jnp.float32,
                                       fold_in_proj=False)
    jax.block_until_ready((z_q2, indices2))
    z_q2_ref, idx2_ref = vq_forward_ref(z, params, stride=2)
    assert z_q2.shape == (B, input_dim, T) and indices2.shape == (B, T // 2)
    assert jnp.array_equal(indices2, idx2_ref)
    assert jnp.allclose(z_q2, z_q2_ref, atol=1e-4, rtol=1e-4)

    print("KERNEL_OK")
</pallas_src>

<mosaic_0001>
module attributes {stable_mosaic.version = 11 : i64} {
  func.func @_vq_kernel_folded(%arg0: i32, %arg1: i32, %arg2: memref<1x32x256xf32, #tpu.memory_space<vmem>>, %arg3: memref<128x32xf32, #tpu.memory_space<vmem>>, %arg4: memref<128x1xf32, #tpu.memory_space<vmem>>, %arg5: memref<32x128xbf16, #tpu.memory_space<vmem>>, %arg6: memref<1x32x256xf32, #tpu.memory_space<vmem>>, %arg7: memref<1x1x256xi32, #tpu.memory_space<vmem>>) attributes {dimension_semantics = [#tpu.dimension_semantics<parallel>, #tpu.dimension_semantics<parallel>], iteration_bounds = array<i64: 2, 1>, scalar_prefetch = 0 : i64, scratch_operands = 0 : i64, tpu.core_type = #tpu.core_type<tc>, window_params = [{transform_indices = @transform_0, window_bounds = array<i64: 1, 32, 256>}, {pipeline_mode = #tpu.pipeline_mode<synchronous>, transform_indices = @transform_1, window_bounds = array<i64: 128, 32>}, {pipeline_mode = #tpu.pipeline_mode<synchronous>, transform_indices = @transform_2, window_bounds = array<i64: 128, 1>}, {pipeline_mode = #tpu.pipeline_mode<synchronous>, transform_indices = @transform_3, window_bounds = array<i64: 32, 128>}, {transform_indices = @transform_4, window_bounds = array<i64: 1, 32, 256>}, {transform_indices = @transform_5, window_bounds = array<i64: 1, 1, 256>}]} {
    %c0 = arith.constant 0 : index
    %c0_0 = arith.constant 0 : index
    %c0_1 = arith.constant 0 : index
    %0 = vector.load %arg2[%c0, %c0_0, %c0_1] : memref<1x32x256xf32, #tpu.memory_space<vmem>>, vector<1x32x256xf32>
    %1 = vector.shape_cast %0 : vector<1x32x256xf32> to vector<32x256xf32>
    %c0_2 = arith.constant 0 : index
    %c0_3 = arith.constant 0 : index
    %2 = vector.load %arg3[%c0_2, %c0_3] : memref<128x32xf32, #tpu.memory_space<vmem>>, vector<128x32xf32>
    %cst = arith.constant dense<0.000000e+00> : vector<128x256xf32>
    %3 = tpu.matmul %2, %1, %cst {dimension_numbers = #tpu.dot_dimension_numbers<[1], [0], [0], [1], [0, 0, 1, 1], [], []>, precision = #tpu.contract_precision<fp32>} : vector<128x32xf32>, vector<32x256xf32>, vector<128x256xf32> -> vector<128x256xf32>
    %c0_4 = arith.constant 0 : index
    %c0_5 = arith.constant 0 : index
    %4 = vector.load %arg4[%c0_4, %c0_5] : memref<128x1xf32, #tpu.memory_space<vmem>>, vector<128x1xf32>
    %5 = vector.broadcast %4 : vector<128x1xf32> to vector<128x256xf32>
    %6 = arith.addf %3, %5 : vector<128x256xf32>
    %7 = tpu.iota {dimensions = array<i32: 0>} : vector<128x256xi32>
    %cst_6 = arith.constant dense<0xFF800000> : vector<256xf32>
    %8 = vector.multi_reduction <maximumf>, %6, %cst_6 [0] : vector<128x256xf32> to vector<256xf32>
    %9 = vector.shape_cast %8 : vector<256xf32> to vector<1x256xf32>
    %10 = vector.broadcast %9 : vector<1x256xf32> to vector<128x256xf32>
    %11 = arith.cmpf oeq, %6, %10 : vector<128x256xf32>
    %c128_i32 = arith.constant 128 : i32
    %12 = vector.broadcast %c128_i32 : i32 to vector<128x256xi32>
    %13 = arith.select %11, %7, %12 : vector<128x256xi1>, vector<128x256xi32>
    %cst_7 = arith.constant dense<2147483647> : vector<256xi32>
    %14 = vector.multi_reduction <minsi>, %13, %cst_7 [0] : vector<128x256xi32> to vector<256xi32>
    %15 = vector.shape_cast %14 : vector<256xi32> to vector<1x256xi32>
    %c127_i32 = arith.constant 127 : i32
    %16 = vector.broadcast %c127_i32 : i32 to vector<1x256xi32>
    %17 = arith.minsi %15, %16 : vector<1x256xi32>
    %c0_8 = arith.constant 0 : index
    %c0_9 = arith.constant 0 : index
    %c0_10 = arith.constant 0 : index
    %18 = vector.load %arg7[%c0_8, %c0_9, %c0_10] : memref<1x1x256xi32, #tpu.memory_space<vmem>>, vector<1x1x256xi32>
    %19 = vector.shape_cast %18 : vector<1x1x256xi32> to vector<1x256xi32>
    %20 = vector.shape_cast %17 : vector<1x256xi32> to vector<1x1x256xi32>
    tpu.vector_store %arg7[%c0_8, %c0_9, %c0_10], %20 {strides = array<i32>} : memref<1x1x256xi32, #tpu.memory_space<vmem>>, vector<1x1x256xi32>,
    %21 = vector.broadcast %17 : vector<1x256xi32> to vector<128x256xi32>
    %22 = arith.cmpi eq, %7, %21 : vector<128x256xi32>
    %23 = arith.extui %22 : vector<128x256xi1> to vector<128x256xi32>
    %24 = arith.sitofp %23 : vector<128x256xi32> to vector<128x256xf32>
    %25 = arith.truncf %24 : vector<128x256xf32> to vector<128x256xbf16>
    %c0_11 = arith.constant 0 : index
    %c0_12 = arith.constant 0 : index
    %26 = vector.load %arg5[%c0_11, %c0_12] : memref<32x128xbf16, #tpu.memory_space<vmem>>, vector<32x128xbf16>
    %cst_13 = arith.constant dense<0.000000e+00> : vector<32x256xf32>
    %27 = tpu.matmul %26, %25, %cst_13 {dimension_numbers = #tpu.dot_dimension_numbers<[1], [0], [0], [1], [0, 0, 1, 1], [], []>} : vector<32x128xbf16>, vector<128x256xbf16>, vector<32x256xf32> -> vector<32x256xf32>
    %c0_14 = arith.constant 0 : index
    %c0_15 = arith.constant 0 : index
    %c0_16 = arith.constant 0 : index
    %28 = vector.load %arg6[%c0_14, %c0_15, %c0_16] : memref<1x32x256xf32, #tpu.memory_space<vmem>>, vector<1x32x256xf32>
    %29 = vector.shape_cast %28 : vector<1x32x256xf32> to vector<32x256xf32>
    %30 = vector.shape_cast %27 : vector<32x256xf32> to vector<1x32x256xf32>
    tpu.vector_store %arg6[%c0_14, %c0_15, %c0_16], %30 {strides = array<i32>} : memref<1x32x256xf32, #tpu.memory_space<vmem>>, vector<1x32x256xf32>,
    return
  }
  func.func @transform_0(%arg0: i32, %arg1: i32) -> (i32, i32, i32) {
    %c0_i32 = arith.constant 0 : i32
    %c0_i32_0 = arith.constant 0 : i32
    return %arg0, %c0_i32, %arg1 : i32, i32, i32
  }
  func.func @transform_1(%arg0: i32, %arg1: i32) -> (i32, i32) {
    %c0_i32 = arith.constant 0 : i32
    %c0_i32_0 = arith.constant 0 : i32
    %c0_i32_1 = arith.constant 0 : i32
    return %c0_i32, %c0_i32_0 : i32, i32
  }
  func.func @transform_2(%arg0: i32, %arg1: i32) -> (i32, i32) {
    %c0_i32 = arith.constant 0 : i32
    %c0_i32_0 = arith.constant 0 : i32
    %c0_i32_1 = arith.constant 0 : i32
    return %c0_i32, %c0_i32_0 : i32, i32
  }
  func.func @transform_3(%arg0: i32, %arg1: i32) -> (i32, i32) {
    %c0_i32 = arith.constant 0 : i32
    %c0_i32_0 = arith.constant 0 : i32
    %c0_i32_1 = arith.constant 0 : i32
    return %c0_i32, %c0_i32_0 : i32, i32
  }
  func.func @transform_4(%arg0: i32, %arg1: i32) -> (i32, i32, i32) {
    %c0_i32 = arith.constant 0 : i32
    %c0_i32_0 = arith.constant 0 : i32
    return %arg0, %c0_i32, %arg1 : i32, i32, i32
  }
  func.func @transform_5(%arg0: i32, %arg1: i32) -> (i32, i32, i32) {
    %c0_i32 = arith.constant 0 : i32
    %c0_i32_0 = arith.constant 0 : i32
    return %arg0, %c0_i32, %arg1 : i32, i32, i32
  }
}

</mosaic_0001>

<llo_original>
// kernel: tpu_custom_call.1
$region0: #{tpu_custom_call.1}
  #allocation0 [shape = 'u32[]', space=smem, size = 0x4, offset = 0x4, fixed_abs, tag = 'smem constant byte address 0x4 - core index']
  #allocation1 [shape = 'u32[72,128]{1,0:T(1,128)}', space=vmem, size = 0x9000, scoped, tag = 'internal scratch']
  %s0 = inlined_call_operand.vmem [shape: f32[2,32,256], index: 0, kind: input, shape index: {}]
  %s1 = inlined_call_operand.vmem [shape: f32[128,32], index: 1, kind: input, shape index: {}]
  %s2 = inlined_call_operand.vmem [shape: f32[128,1], index: 2, kind: input, shape index: {}]
  %s3 = inlined_call_operand.vmem [shape: bf16[32,128], index: 3, kind: input, shape index: {}]
  %s4 = inlined_call_operand.hbm [shape: f32[2,32,256], index: 4, kind: output, shape index: {0}]
  %s5 = inlined_call_operand.hbm [shape: s32[2,1,256], index: 5, kind: output, shape index: {1}]
  %6 = xla_tuple %s4, %s5
  %s7 = sld [smem:[#allocation0]]
  $region57: #{tpu_custom_call.1} parent=0
    _
  %s9 = ssub.s32 1, %s7
  %s10 = scalar_select 0, %s9, %s7
  $region1: #{tpu_custom_call.1} parent=0
    #allocation2 [shape = 'u8[65536]{0}', space=vmem, size = 0x10000, scoped, tag = 'output window, operand 0']
    #allocation3 [shape = 's32[2]{0}', space=sflag, size = 0x8, scoped, tag = 'scoped memory for tpu_custom_call.1']
    #allocation4 [shape = 'u8[2048]{0}', space=vmem, size = 0x800, scoped, tag = 'output window, operand 1']
    #allocation5 [shape = 's32[2]{0}', space=sflag, size = 0x8, scoped, tag = 'scoped memory for tpu_custom_call.1']
    %11 = vsyncpa [#allocation3], 0
    %s12 = scalar_lea.sflag [#allocation3], 1
    %13 = vsyncpa %s12, 0
    %14 = vsyncpa [#allocation5], 0
    %s15 = scalar_lea.sflag [#allocation5], 1
    %16 = vsyncpa %s15, 0
    loop: start=0, step=1, limit=4
    $region2: #{tpu_custom_call.1} parent=1 // loop_pre_header
      _
    $region3: #{tpu_custom_call.1} parent=1 // loop_header
      %s18 = sphi 0, %s22
      %p19 = scmp.ge.s32.totalorder %s18, 4
      %s25 = sphi 0, %s37
      %s26 = sphi 0, %s33
      %s27 = sphi 0, %s25
      %s28 = sphi 0, %s26
      %s29 = sphi 0, %s27
      %s30 = sphi 0, %s28
      %s42 = sphi 0, %s44
      %s45 = sphi 0, %s42
      %s46 = sphi 0, %s45
      %s62 = sphi 0, %s46
      %s66 = sphi 0, %s66
      %s68 = sphi 0, %s66
      %s69 = sphi 0, %s68
      %s83 = sphi 0, %s69
      %s87 = sphi 0, %s87
      %s89 = sphi 0, %s87
      %s90 = sphi 0, %s89
      %s104 = sphi 0, %s90
      %s108 = sphi 0, %s108
      %s110 = sphi 0, %s108
      %s111 = sphi 0, %s110
      %s125 = sphi 0, %s111
      %s133 = sphi 0, %s135
      %s136 = sphi 0, %s133
      %s137 = sphi 0, %s136
      %s153 = sphi 0, %s137
      %s161 = sphi 0, %s163
      %s164 = sphi 0, %s161
      %s165 = sphi 0, %s164
      %s181 = sphi 0, %s165
    $region4: #{tpu_custom_call.1} parent=1 // loop_header_branch
      %21 = sbr.rel (%p19) target = $region8
    $region5: #{tpu_custom_call.1} parent=1 // loop_body
      %s23 = ssub.s32 %s18, 1
      %s24 = ssub.s32 %s18, 2
      %s31 = sadd.s32 1, %s26
      %p32 = scmp.ge.s32.totalorder %s31, 1
      %s33 = scalar_select %p32, 0, %s31
      %s34 = sadd.s32 1, %s25
      %s35 = scalar_select %p32, %s34, %s25
      %p36 = scmp.ge.s32.totalorder %s35, 2
      %s37 = scalar_select %p36, 0, %s35
      %s38 = ssub.s32 %s25, %s37
      %s39 = ssub.s32 %s26, %s33
      %s40 = sor.u32 %s38, %s39
      %p41 = scmp.eq.s32.totalorder %s40, 0
      %s43 = sadd.s32 %s42, 1
      %s44 = scalar_select %p41, %s42, %s43
      %p47 = pneg %p41
      %p48 = scmp.eq.s32.totalorder %s18, 1
      %p49 = por %p47, %p48
      %p50 = scmp.ne.s32.totalorder %s42, %s45
      %p51 = scmp.eq.s32.totalorder %s18, 0
      %p52 = por %p50, %p51
      %p53 = scmp.ne.s32.totalorder %s42, %s45
      %p54 = scmp.eq.s32.totalorder %s23, 1
      %p55 = por %p53, %p54
      %p56 = scmp.ne.s32.totalorder %s45, %s46
      %p57 = scmp.eq.s32.totalorder %s23, 0
      %p58 = por %p56, %p57
      %p59 = scmp.ne.s32.totalorder %s45, %s46
      %p60 = scmp.eq.s32.totalorder %s24, 1
      %p61 = por %p59, %p60
      %p63 = scmp.ne.s32.totalorder %s46, %s62
      %p64 = scmp.eq.s32.totalorder %s24, 0
      %p65 = por %p63, %p64
      %s67 = sadd.s32 %s66, 1
      %p70 = scmp.eq.s32.totalorder %s18, 1
      %p71 = scmp.ne.s32.totalorder %s66, %s68
      %p72 = scmp.eq.s32.totalorder %s18, 0
      %p73 = por %p71, %p72
      %p74 = scmp.ne.s32.totalorder %s66, %s68
      %p75 = scmp.eq.s32.totalorder %s23, 1
      %p76 = por %p74, %p75
      %p77 = scmp.ne.s32.totalorder %s68, %s69
      %p78 = scmp.eq.s32.totalorder %s23, 0
      %p79 = por %p77, %p78
      %p80 = scmp.ne.s32.totalorder %s68, %s69
      %p81 = scmp.eq.s32.totalorder %s24, 1
      %p82 = por %p80, %p81
      %p84 = scmp.ne.s32.totalorder %s69, %s83
      %p85 = scmp.eq.s32.totalorder %s24, 0
      %p86 = por %p84, %p85
      %s88 = sadd.s32 %s87, 1
      %p91 = scmp.eq.s32.totalorder %s18, 1
      %p92 = scmp.ne.s32.totalorder %s87, %s89
      %p93 = scmp.eq.s32.totalorder %s18, 0
      %p94 = por %p92, %p93
      %p95 = scmp.ne.s32.totalorder %s87, %s89
      %p96 = scmp.eq.s32.totalorder %s23, 1
      %p97 = por %p95, %p96
      %p98 = scmp.ne.s32.totalorder %s89, %s90
      %p99 = scmp.eq.s32.totalorder %s23, 0
      %p100 = por %p98, %p99
      %p101 = scmp.ne.s32.totalorder %s89, %s90
      %p102 = scmp.eq.s32.totalorder %s24, 1
      %p103 = por %p101, %p102
      %p105 = scmp.ne.s32.totalorder %s90, %s104
      %p106 = scmp.eq.s32.totalorder %s24, 0
      %p107 = por %p105, %p106
      %s109 = sadd.s32 %s108, 1
      %p112 = scmp.eq.s32.totalorder %s18, 1
      %p113 = scmp.ne.s32.totalorder %s108, %s110
      %p114 = scmp.eq.s32.totalorder %s18, 0
      %p115 = por %p113, %p114
      %p116 = scmp.ne.s32.totalorder %s108, %s110
      %p117 = scmp.eq.s32.totalorder %s23, 1
      %p118 = por %p116, %p117
      %p119 = scmp.ne.s32.totalorder %s110, %s111
      %p120 = scmp.eq.s32.totalorder %s23, 0
      %p121 = por %p119, %p120
      %p122 = scmp.ne.s32.totalorder %s110, %s111
      %p123 = scmp.eq.s32.totalorder %s24, 1
      %p124 = por %p122, %p123
      %p126 = scmp.ne.s32.totalorder %s111, %s125
      %p127 = scmp.eq.s32.totalorder %s24, 0
      %p128 = por %p126, %p127
      %s129 = ssub.s32 %s25, %s37
      %s130 = ssub.s32 %s26, %s33
      %s131 = sor.u32 %s129, %s130
      %p132 = scmp.eq.s32.totalorder %s131, 0
      %s134 = sadd.s32 %s133, 1
      %s135 = scalar_select %p132, %s133, %s134
      %p138 = pneg %p132
      %p139 = scmp.eq.s32.totalorder %s18, 1
      %p140 = por %p138, %p139
      %p141 = scmp.ne.s32.totalorder %s133, %s136
      %p142 = scmp.eq.s32.totalorder %s18, 0
      %p143 = por %p141, %p142
      %p144 = scmp.ne.s32.totalorder %s133, %s136
      %p145 = scmp.eq.s32.totalorder %s23, 1
      %p146 = por %p144, %p145
      %p147 = scmp.ne.s32.totalorder %s136, %s137
      %p148 = scmp.eq.s32.totalorder %s23, 0
      %p149 = por %p147, %p148
      %p150 = scmp.ne.s32.totalorder %s136, %s137
      %p151 = scmp.eq.s32.totalorder %s24, 1
      %p152 = por %p150, %p151
      %p154 = scmp.ne.s32.totalorder %s137, %s153
      %p155 = scmp.eq.s32.totalorder %s24, 0
      %p156 = por %p154, %p155
      %s157 = ssub.s32 %s25, %s37
      %s158 = ssub.s32 %s26, %s33
      %s159 = sor.u32 %s157, %s158
      %p160 = scmp.eq.s32.totalorder %s159, 0
      %s162 = sadd.s32 %s161, 1
      %s163 = scalar_select %p160, %s161, %s162
      %p166 = pneg %p160
      %p167 = scmp.eq.s32.totalorder %s18, 1
      %p168 = por %p166, %p167
      %p169 = scmp.ne.s32.totalorder %s161, %s164
      %p170 = scmp.eq.s32.totalorder %s18, 0
      %p171 = por %p169, %p170
      %p172 = scmp.ne.s32.totalorder %s161, %s164
      %p173 = scmp.eq.s32.totalorder %s23, 1
      %p174 = por %p172, %p173
      %p175 = scmp.ne.s32.totalorder %s164, %s165
      %p176 = scmp.eq.s32.totalorder %s23, 0
      %p177 = por %p175, %p176
      %p178 = scmp.ne.s32.totalorder %s164, %s165
      %p179 = scmp.eq.s32.totalorder %s24, 1
      %p180 = por %p178, %p179
      %p182 = scmp.ne.s32.totalorder %s165, %s181
      %p183 = scmp.eq.s32.totalorder %s24, 0
      %p184 = por %p182, %p183
      %p185 = scmp.le.s32.totalorder 1, %s18
      %p186 = scmp.lt.s32.totalorder %s18, 3
      %p187 = pnand %p185, %p186
      %p188 = pneg %p187
      // Predicated region
      $region9: #{tpu_custom_call.1} parent=5 // pred_check
        _
      $region10: #{tpu_custom_call.1} parent=5 // pred_check_branch
        %190 = sbr.rel (%p187) target = $region12
      $region11: #{tpu_custom_call.1} parent=5 // pred_region
        %s191 = ssub.s32 %s18, 1
        // Predicated region
        $region13: #{tpu_custom_call.1} parent=11 // pred_check
          %p192 = pneg %p79
        $region14: #{tpu_custom_call.1} parent=11 // pred_check_branch
          %194 = sbr.rel (%p192) target = $region16
        $region15: #{tpu_custom_call.1} parent=11 // pred_region
          _
        $region16: #{tpu_custom_call.1} parent=11 // pred_fallthru
          _
        // Predicated region
        $region17: #{tpu_custom_call.1} parent=11 // pred_check
          %p195 = pneg %p100
        $region18: #{tpu_custom_call.1} parent=11 // pred_check_branch
          %197 = sbr.rel (%p195) target = $region20
        $region19: #{tpu_custom_call.1} parent=11 // pred_region
          _
        $region20: #{tpu_custom_call.1} parent=11 // pred_fallthru
          _
        // Predicated region
        $region21: #{tpu_custom_call.1} parent=11 // pred_check
          %p198 = pneg %p121
        $region22: #{tpu_custom_call.1} parent=11 // pred_check_branch
          %200 = sbr.rel (%p198) target = $region24
        $region23: #{tpu_custom_call.1} parent=11 // pred_region
          _
        $region24: #{tpu_custom_call.1} parent=11 // pred_fallthru
          _
      $region12: #{tpu_custom_call.1} parent=5 // pred_fallthru
        _
      %p201 = scmp.lt.s32.totalorder %s18, 2
      // Predicated region
      $region25: #{tpu_custom_call.1} parent=5 // pred_check
        %p202 = pneg %p201
      $region26: #{tpu_custom_call.1} parent=5 // pred_check_branch
        %204 = sbr.rel (%p202) target = $region28
      $region27: #{tpu_custom_call.1} parent=5 // pred_region
        // Predicated region
        $region29: #{tpu_custom_call.1} parent=27 // pred_check
          %p205 = pneg %p52
        $region30: #{tpu_custom_call.1} parent=27 // pred_check_branch
          %207 = sbr.rel (%p205) target = $region32
        $region31: #{tpu_custom_call.1} parent=27 // pred_region
          %s208 = smul.u32 2, %s26
          %p209 = scmp.lt.s32.totalorder %s25, 1
          %s210 = scalar_select %p209, %s25, 1
          %p211 = scmp.lt.s32.totalorder %s208, 1
          %s212 = scalar_select %p211, %s208, 1
          %s213 = smul.addr %s210, 8
          %s214 = sadd.s32 %s212, %s213
          %s215 = smul.addr %s214, 8
          %s216 = scalar_lea.vmem %s0, %s215
          %s217 = smul.u32 2, %s26
        $region32: #{tpu_custom_call.1} parent=27 // pred_fallthru
          _
      $region28: #{tpu_custom_call.1} parent=5 // pred_fallthru
        _
      %p218 = scmp.le.s32.totalorder 1, %s18
      %p219 = scmp.lt.s32.totalorder %s18, 3
      %p220 = pnand %p218, %p219
      %p221 = pneg %p220
      // Predicated region
      $region33: #{tpu_custom_call.1} parent=5 // pred_check
        _
      $region34: #{tpu_custom_call.1} parent=5 // pred_check_branch
        %223 = sbr.rel (%p220) target = $region36
      $region35: #{tpu_custom_call.1} parent=5 // pred_region
        %s224 = ssub.s32 %s18, 1
        %s225 = smul.u32 2, %s28
        %p226 = scmp.lt.s32.totalorder %s27, 1
        %s227 = scalar_select %p226, %s27, 1
        %p228 = scmp.lt.s32.totalorder %s225, 1
        %s229 = scalar_select %p228, %s225, 1
        %s230 = smul.addr %s227, 8
        %s231 = sadd.s32 %s229, %s230
        %s232 = smul.addr %s231, 8
        %s233 = scalar_lea.vmem %s0, %s232
        %p234 = pneg %p58
        %p235 = pneg %p55
        %p236 = pneg %p79
        %p237 = pneg %p76
        %p238 = pneg %p100
        %p239 = pneg %p97
        %p240 = pneg %p121
        %p241 = pneg %p118
        %p242 = pneg %p149
        %p243 = pneg %p146
        %s244 = sand.u32 %s136, 1
        %s245 = scalar_lea.sflag [#allocation3], %s244
        %s246 = sand.u32 %s136, 1
        %s247 = smul.addr %s246, 64
        %s248 = scalar_lea.vmem [#allocation2], %s247
        %p249 = pneg %p177
        %p250 = pneg %p174
        %s251 = sand.u32 %s164, 1
        %s252 = scalar_lea.sflag [#allocation5], %s251
        %s253 = sand.u32 %s164, 1
        %s254 = smul.addr %s253, 2
        %s255 = scalar_lea.vmem [#allocation4], %s254
        %s256 = smul.u32 2, %s28
        %p257 = scmp.lt.s32.totalorder %s27, 1
        %s258 = scalar_select %p257, %s27, 1
        %p259 = scmp.lt.s32.totalorder %s256, 1
        %s260 = scalar_select %p259, %s256, 1
        %s261 = smul.addr %s258, 8
        %s262 = sadd.s32 %s260, %s261
        %s263 = smul.addr %s262, 8
        %s264 = scalar_lea.vmem %s0, %s263
        %s265 = smul.u32 2, %s28
        %s266 = smul.u32 2, %s28
        %s267 = smul.u32 2, %s28
        %v268 = vld [vmem:[%s264] sm:$0xff]
        %v269 = vld [vmem:[%s264 + $0x8] sm:$0xff]
        %v270 = vld [vmem:[%s264 + $0x10] sm:$0xff]
        %v271 = vld [vmem:[%s264 + $0x18] sm:$0xff]
        %v272 = vld [vmem:[%s264 + $0x20] sm:$0xff]
        %v273 = vld [vmem:[%s264 + $0x28] sm:$0xff]
        %v274 = vld [vmem:[%s264 + $0x30] sm:$0xff]
        %v275 = vld [vmem:[%s264 + $0x38] sm:$0xff]
        %v276 = vld [vmem:[%s1] sm:$0xff]
        %v277 = vld [vmem:[%s1 + $0x8] sm:$0xff]
        %v278 = vld [vmem:[%s1 + $0x10] sm:$0xff]
        %v279 = vld [vmem:[%s1 + $0x18] sm:$0xff]
        %v280 = vld [vmem:[%s1 + $0x20] sm:$0xff]
        %v281 = vld [vmem:[%s1 + $0x28] sm:$0xff]
        %v282 = vld [vmem:[%s1 + $0x30] sm:$0xff]
        %v283 = vld [vmem:[%s1 + $0x38] sm:$0xff]
        %v284 = vld [vmem:[%s1 + $0x40] sm:$0xff]
        %v285 = vld [vmem:[%s1 + $0x48] sm:$0xff]
        %v286 = vld [vmem:[%s1 + $0x50] sm:$0xff]
        %v287 = vld [vmem:[%s1 + $0x58] sm:$0xff]
        %v288 = vld [vmem:[%s1 + $0x60] sm:$0xff]
        %v289 = vld [vmem:[%s1 + $0x68] sm:$0xff]
        %v290 = vld [vmem:[%s1 + $0x70] sm:$0xff]
        %v291 = vld [vmem:[%s1 + $0x78] sm:$0xff]
        %v292 = vld [vmem:[%s2] sm:$0xff]
        %v293 = vld [vmem:[%s2 + $0x8] sm:$0xff]
        %v294 = vld [vmem:[%s2 + $0x10] sm:$0xff]
        %v295 = vld [vmem:[%s2 + $0x18] sm:$0xff]
        %v296 = vld [vmem:[%s2 + $0x20] sm:$0xff]
        %v297 = vld [vmem:[%s2 + $0x28] sm:$0xff]
        %v298 = vld [vmem:[%s2 + $0x30] sm:$0xff]
        %v299 = vld [vmem:[%s2 + $0x38] sm:$0xff]
        %v300 = vld [vmem:[%s2 + $0x40] sm:$0xff]
        %v301 = vld [vmem:[%s2 + $0x48] sm:$0xff]
        %v302 = vld [vmem:[%s2 + $0x50] sm:$0xff]
        %v303 = vld [vmem:[%s2 + $0x58] sm:$0xff]
        %v304 = vld [vmem:[%s2 + $0x60] sm:$0xff]
        %v305 = vld [vmem:[%s2 + $0x68] sm:$0xff]
        %v306 = vld [vmem:[%s2 + $0x70] sm:$0xff]
        %v307 = vld [vmem:[%s2 + $0x78] sm:$0xff]
        %309 = vset.pattern.permute.xlu0 0
        %310 = vperm.xlu0 %309, %v292
        %v311 = vpop.permute.xlu0 %310
        %314 = vset.pattern.permute.xlu0 0
        %315 = vperm.xlu0 %314, %v293
        %v316 = vpop.permute.xlu0 %315
        %319 = vset.pattern.permute.xlu0 0
        %320 = vperm.xlu0 %319, %v294
        %v321 = vpop.permute.xlu0 %320
        %324 = vset.pattern.permute.xlu0 0
        %325 = vperm.xlu0 %324, %v295
        %v326 = vpop.permute.xlu0 %325
        %329 = vset.pattern.permute.xlu0 0
        %330 = vperm.xlu0 %329, %v296
        %v331 = vpop.permute.xlu0 %330
        %334 = vset.pattern.permute.xlu0 0
        %335 = vperm.xlu0 %334, %v297
        %v336 = vpop.permute.xlu0 %335
        %339 = vset.pattern.permute.xlu0 0
        %340 = vperm.xlu0 %339, %v298
        %v341 = vpop.permute.xlu0 %340
        %344 = vset.pattern.permute.xlu0 0
        %345 = vperm.xlu0 %344, %v299
        %v346 = vpop.permute.xlu0 %345
        %349 = vset.pattern.permute.xlu0 0
        %350 = vperm.xlu0 %349, %v300
        %v351 = vpop.permute.xlu0 %350
        %354 = vset.pattern.permute.xlu0 0
        %355 = vperm.xlu0 %354, %v301
        %v356 = vpop.permute.xlu0 %355
        %359 = vset.pattern.permute.xlu0 0
        %360 = vperm.xlu0 %359, %v302
        %v361 = vpop.permute.xlu0 %360
        %364 = vset.pattern.permute.xlu0 0
        %365 = vperm.xlu0 %364, %v303
        %v366 = vpop.permute.xlu0 %365
        %369 = vset.pattern.permute.xlu0 0
        %370 = vperm.xlu0 %369, %v304
        %v371 = vpop.permute.xlu0 %370
        %374 = vset.pattern.permute.xlu0 0
        %375 = vperm.xlu0 %374, %v305
        %v376 = vpop.permute.xlu0 %375
        %379 = vset.pattern.permute.xlu0 0
        %380 = vperm.xlu0 %379, %v306
        %v381 = vpop.permute.xlu0 %380
        %384 = vset.pattern.permute.xlu0 0
        %385 = vperm.xlu0 %384, %v307
        %v386 = vpop.permute.xlu0 %385
        %vm388 = vcmask 261120
        %v390 = vsel %vm388, %v276, 0
        %v393 = vsel %vm388, %v277, 0
        %v396 = vsel %vm388, %v278, 0
        %v399 = vsel %vm388, %v279, 0
        %v402 = vsel %vm388, %v280, 0
        %v405 = vsel %vm388, %v281, 0
        %v408 = vsel %vm388, %v282, 0
        %v411 = vsel %vm388, %v283, 0
        %v414 = vsel %vm388, %v284, 0
        %v417 = vsel %vm388, %v285, 0
        %v420 = vsel %vm388, %v286, 0
        %v423 = vsel %vm388, %v287, 0
        %v426 = vsel %vm388, %v288, 0
        %v429 = vsel %vm388, %v289, 0
        %v432 = vsel %vm388, %v290, 0
        %v435 = vsel %vm388, %v291, 0
        %437 = vmatpush.msra.mxu0 0.0
        %438 = vmatpush.msra.mxu0 0.0
        %439 = vmatpush.msra.mxu0 0.0
        %440 = vmatpush.msra.mxu0 0.0
        %441 = vmatpush.msra.mxu0 0.0
        %442 = vmatpush.msra.mxu0 0.0
        %443 = vmatpush.msra.mxu0 0.0
        %444 = vmatpush.msra.mxu0 0.0
        %445 = vmatpush.msra.mxu0 0.0
        %446 = vmatpush.msra.mxu0 0.0
        %447 = vmatpush.msra.mxu0 0.0
        %448 = vmatpush.msra.mxu0 0.0
        %v449 = vand.u32 %v274, 4294901760
        %450 = vmatpush.msra.mxu0 %v449
        %v451 = vand.u32 %v272, 4294901760
        %452 = vmatpush.msra.mxu0 %v451
        %v453 = vand.u32 %v270, 4294901760
        %454 = vmatpush.msra.mxu0 %v453
        %v455 = vand.u32 %v268, 4294901760
        %456 = vmatpush.msra.mxu0 %v455
        %v457 = vand.u32 %v390, 4294901760
        %v458 = vsub.f32 %v390, %v457
        %v459 = vand.u32 %v458, 4294901760
        %v460 = vsub.f32 %v458, %v459
        %v461 = vand.u32 %v460, 4294901760
        %462 = vmatmul.f32.gmra.mxu0 %v461
        %v463 = vpop.f32.mrf.mxu0
        %v464 = vadd.f32 %v311, %v463
        %v465 = vand.u32 %v393, 4294901760
        %v466 = vsub.f32 %v393, %v465
        %v467 = vand.u32 %v466, 4294901760
        %v468 = vsub.f32 %v466, %v467
        %v469 = vand.u32 %v468, 4294901760
        %470 = vmatmul.f32.gmra.mxu0 %v469
        %v471 = vpop.f32.mrf.mxu0
        %v472 = vadd.f32 %v316, %v471
        %v473 = vand.u32 %v396, 4294901760
        %v474 = vsub.f32 %v396, %v473
        %v475 = vand.u32 %v474, 4294901760
        %v476 = vsub.f32 %v474, %v475
        %v477 = vand.u32 %v476, 4294901760
        %478 = vmatmul.f32.gmra.mxu0 %v477
        %v479 = vpop.f32.mrf.mxu0
        %v480 = vadd.f32 %v321, %v479
        %v481 = vand.u32 %v399, 4294901760
        %v482 = vsub.f32 %v399, %v481
        %v483 = vand.u32 %v482, 4294901760
        %v484 = vsub.f32 %v482, %v483
        %v485 = vand.u32 %v484, 4294901760
        %486 = vmatmul.f32.gmra.mxu0 %v485
        %v487 = vpop.f32.mrf.mxu0
        %v488 = vadd.f32 %v326, %v487
        %v489 = vand.u32 %v402, 4294901760
        %v490 = vsub.f32 %v402, %v489
        %v491 = vand.u32 %v490, 4294901760
        %v492 = vsub.f32 %v490, %v491
        %v493 = vand.u32 %v492, 4294901760
        %494 = vmatmul.f32.gmra.mxu0 %v493
        %v495 = vpop.f32.mrf.mxu0
        %v496 = vadd.f32 %v331, %v495
        %v497 = vand.u32 %v405, 4294901760
        %v498 = vsub.f32 %v405, %v497
        %v499 = vand.u32 %v498, 4294901760
        %v500 = vsub.f32 %v498, %v499
        %v501 = vand.u32 %v500, 4294901760
        %502 = vmatmul.f32.gmra.mxu0 %v501
        %v503 = vpop.f32.mrf.mxu0
        %v504 = vadd.f32 %v336, %v503
        %v505 = vand.u32 %v408, 4294901760
        %v506 = vsub.f32 %v408, %v505
        %v507 = vand.u32 %v506, 4294901760
        %v508 = vsub.f32 %v506, %v507
        %v509 = vand.u32 %v508, 4294901760
        %510 = vmatmul.f32.gmra.mxu0 %v509
        %v511 = vpop.f32.mrf.mxu0
        %v512 = vadd.f32 %v341, %v511
        %v513 = vand.u32 %v411, 4294901760
        %v514 = vsub.f32 %v411, %v513
        %v515 = vand.u32 %v514, 4294901760
        %v516 = vsub.f32 %v514, %v515
        %v517 = vand.u32 %v516, 4294901760
        %518 = vmatmul.f32.gmra.mxu0 %v517
        %v519 = vpop.f32.mrf.mxu0
        %v520 = vadd.f32 %v346, %v519
        %v521 = vand.u32 %v414, 4294901760
        %v522 = vsub.f32 %v414, %v521
        %v523 = vand.u32 %v522, 4294901760
        %v524 = vsub.f32 %v522, %v523
        %v525 = vand.u32 %v524, 4294901760
        %526 = vmatmul.f32.gmra.mxu0 %v525
        %v527 = vpop.f32.mrf.mxu0
        %v528 = vadd.f32 %v351, %v527
        %v529 = vand.u32 %v417, 4294901760
        %v530 = vsub.f32 %v417, %v529
        %v531 = vand.u32 %v530, 4294901760
        %v532 = vsub.f32 %v530, %v531
        %v533 = vand.u32 %v532, 4294901760
        %534 = vmatmul.f32.gmra.mxu0 %v533
        %v535 = vpop.f32.mrf.mxu0
        %v536 = vadd.f32 %v356, %v535
        %v537 = vand.u32 %v420, 4294901760
        %v538 = vsub.f32 %v420, %v537
        %v539 = vand.u32 %v538, 4294901760
        %v540 = vsub.f32 %v538, %v539
        %v541 = vand.u32 %v540, 4294901760
        %542 = vmatmul.f32.gmra.mxu0 %v541
        %v543 = vpop.f32.mrf.mxu0
        %v544 = vadd.f32 %v361, %v543
        %v545 = vand.u32 %v423, 4294901760
        %v546 = vsub.f32 %v423, %v545
        %v547 = vand.u32 %v546, 4294901760
        %v548 = vsub.f32 %v546, %v547
        %v549 = vand.u32 %v548, 4294901760
        %550 = vmatmul.f32.gmra.mxu0 %v549
        %v551 = vpop.f32.mrf.mxu0
        %v552 = vadd.f32 %v366, %v551
        %v553 = vand.u32 %v426, 4294901760
        %v554 = vsub.f32 %v426, %v553
        %v555 = vand.u32 %v554, 4294901760
        %v556 = vsub.f32 %v554, %v555
        %v557 = vand.u32 %v556, 4294901760
        %558 = vmatmul.f32.gmra.mxu0 %v557
        %v559 = vpop.f32.mrf.mxu0
        %v560 = vadd.f32 %v371, %v559
        %v561 = vand.u32 %v429, 4294901760
        %v562 = vsub.f32 %v429, %v561
        %v563 = vand.u32 %v562, 4294901760
        %v564 = vsub.f32 %v562, %v563
        %v565 = vand.u32 %v564, 4294901760
        %566 = vmatmul.f32.gmra.mxu0 %v565
        %v567 = vpop.f32.mrf.mxu0
        %v568 = vadd.f32 %v376, %v567
        %v569 = vand.u32 %v432, 4294901760
        %v570 = vsub.f32 %v432, %v569
        %v571 = vand.u32 %v570, 4294901760
        %v572 = vsub.f32 %v570, %v571
        %v573 = vand.u32 %v572, 4294901760
        %574 = vmatmul.f32.gmra.mxu0 %v573
        %v575 = vpop.f32.mrf.mxu0
        %v576 = vadd.f32 %v381, %v575
        %v577 = vand.u32 %v435, 4294901760
        %v578 = vsub.f32 %v435, %v577
        %v579 = vand.u32 %v578, 4294901760
        %v580 = vsub.f32 %v578, %v579
        %v581 = vand.u32 %v580, 4294901760
        %582 = vmatmul.f32.gmra.mxu0 %v581
        %v583 = vpop.f32.mrf.mxu0
        %v584 = vadd.f32 %v386, %v583
        %585 = vdwg.mxu0
        %586 = vmatpush.msra.mxu0 0.0
        %587 = vmatpush.msra.mxu0 0.0
        %588 = vmatpush.msra.mxu0 0.0
        %589 = vmatpush.msra.mxu0 0.0
        %590 = vmatpush.msra.mxu0 0.0
        %591 = vmatpush.msra.mxu0 0.0
        %592 = vmatpush.msra.mxu0 0.0
        %593 = vmatpush.msra.mxu0 0.0
        %594 = vmatpush.msra.mxu0 0.0
        %595 = vmatpush.msra.mxu0 0.0
        %596 = vmatpush.msra.mxu0 0.0
        %597 = vmatpush.msra.mxu0 0.0
        %v598 = vand.u32 %v274, 4294901760
        %v599 = vsub.f32 %v274, %v598
        %v600 = vand.u32 %v599, 4294901760
        %v601 = vsub.f32 %v599, %v600
        %v602 = vand.u32 %v601, 4294901760
        %603 = vmatpush.msra.mxu0 %v602
        %v604 = vand.u32 %v272, 4294901760
        %v605 = vsub.f32 %v272, %v604
        %v606 = vand.u32 %v605, 4294901760
        %v607 = vsub.f32 %v605, %v606
        %v608 = vand.u32 %v607, 4294901760
        %609 = vmatpush.msra.mxu0 %v608
        %v610 = vand.u32 %v270, 4294901760
        %v611 = vsub.f32 %v270, %v610
        %v612 = vand.u32 %v611, 4294901760
        %v613 = vsub.f32 %v611, %v612
        %v614 = vand.u32 %v613, 4294901760
        %615 = vmatpush.msra.mxu0 %v614
        %v616 = vand.u32 %v268, 4294901760
        %v617 = vsub.f32 %v268, %v616
        %v618 = vand.u32 %v617, 4294901760
        %v619 = vsub.f32 %v617, %v618
        %v620 = vand.u32 %v619, 4294901760
        %621 = vmatpush.msra.mxu0 %v620
        %v622 = vand.u32 %v390, 4294901760
        %623 = vmatmul.f32.gmra.mxu0 %v622
        %v624 = vpop.f32.mrf.mxu0
        %v625 = vadd.f32 %v464, %v624
        %v626 = vand.u32 %v393, 4294901760
        %627 = vmatmul.f32.gmra.mxu0 %v626
        %v628 = vpop.f32.mrf.mxu0
        %v629 = vadd.f32 %v472, %v628
        %v630 = vand.u32 %v396, 4294901760
        %631 = vmatmul.f32.gmra.mxu0 %v630
        %v632 = vpop.f32.mrf.mxu0
        %v633 = vadd.f32 %v480, %v632
        %v634 = vand.u32 %v399, 4294901760
        %635 = vmatmul.f32.gmra.mxu0 %v634
        %v636 = vpop.f32.mrf.mxu0
        %v637 = vadd.f32 %v488, %v636
        %v638 = vand.u32 %v402, 4294901760
        %639 = vmatmul.f32.gmra.mxu0 %v638
        %v640 = vpop.f32.mrf.mxu0
        %v641 = vadd.f32 %v496, %v640
        %v642 = vand.u32 %v405, 4294901760
        %643 = vmatmul.f32.gmra.mxu0 %v642
        %v644 = vpop.f32.mrf.mxu0
        %v645 = vadd.f32 %v504, %v644
        %v646 = vand.u32 %v408, 4294901760
        %647 = vmatmul.f32.gmra.mxu0 %v646
        %v648 = vpop.f32.mrf.mxu0
        %v649 = vadd.f32 %v512, %v648
        %v650 = vand.u32 %v411, 4294901760
        %651 = vmatmul.f32.gmra.mxu0 %v650
        %v652 = vpop.f32.mrf.mxu0
        %v653 = vadd.f32 %v520, %v652
        %v654 = vand.u32 %v414, 4294901760
        %655 = vmatmul.f32.gmra.mxu0 %v654
        %v656 = vpop.f32.mrf.mxu0
        %v657 = vadd.f32 %v528, %v656
        %v658 = vand.u32 %v417, 4294901760
        %659 = vmatmul.f32.gmra.mxu0 %v658
        %v660 = vpop.f32.mrf.mxu0
        %v661 = vadd.f32 %v536, %v660
        %v662 = vand.u32 %v420, 4294901760
        %663 = vmatmul.f32.gmra.mxu0 %v662
        %v664 = vpop.f32.mrf.mxu0
        %v665 = vadd.f32 %v544, %v664
        %v666 = vand.u32 %v423, 4294901760
        %667 = vmatmul.f32.gmra.mxu0 %v666
        %v668 = vpop.f32.mrf.mxu0
        %v669 = vadd.f32 %v552, %v668
        %v670 = vand.u32 %v426, 4294901760
        %671 = vmatmul.f32.gmra.mxu0 %v670
        %v672 = vpop.f32.mrf.mxu0
        %v673 = vadd.f32 %v560, %v672
        %v674 = vand.u32 %v429, 4294901760
        %675 = vmatmul.f32.gmra.mxu0 %v674
        %v676 = vpop.f32.mrf.mxu0
        %v677 = vadd.f32 %v568, %v676
        %v678 = vand.u32 %v432, 4294901760
        %679 = vmatmul.f32.gmra.mxu0 %v678
        %v680 = vpop.f32.mrf.mxu0
        %v681 = vadd.f32 %v576, %v680
        %v682 = vand.u32 %v435, 4294901760
        %683 = vmatmul.f32.gmra.mxu0 %v682
        %v684 = vpop.f32.mrf.mxu0
        %v685 = vadd.f32 %v584, %v684
        %686 = vdwg.mxu0
        %687 = vmatpush.msra.mxu0 0.0
        %688 = vmatpush.msra.mxu0 0.0
        %689 = vmatpush.msra.mxu0 0.0
        %690 = vmatpush.msra.mxu0 0.0
        %691 = vmatpush.msra.mxu0 0.0
        %692 = vmatpush.msra.mxu0 0.0
        %693 = vmatpush.msra.mxu0 0.0
        %694 = vmatpush.msra.mxu0 0.0
        %695 = vmatpush.msra.mxu0 0.0
        %696 = vmatpush.msra.mxu0 0.0
        %697 = vmatpush.msra.mxu0 0.0
        %698 = vmatpush.msra.mxu0 0.0
        %v699 = vand.u32 %v274, 4294901760
        %v700 = vsub.f32 %v274, %v699
        %701 = vmatpush.msra.mxu0 %v700
        %v702 = vand.u32 %v272, 4294901760
        %v703 = vsub.f32 %v272, %v702
        %704 = vmatpush.msra.mxu0 %v703
        %v705 = vand.u32 %v270, 4294901760
        %v706 = vsub.f32 %v270, %v705
        %707 = vmatpush.msra.mxu0 %v706
        %v708 = vand.u32 %v268, 4294901760
        %v709 = vsub.f32 %v268, %v708
        %710 = vmatpush.msra.mxu0 %v709
        %v711 = vand.u32 %v390, 4294901760
        %v712 = vsub.f32 %v390, %v711
        %713 = vmatmul.f32.gmra.mxu0 %v712
        %v714 = vpop.f32.mrf.mxu0
        %v715 = vadd.f32 %v625, %v714
        %v716 = vand.u32 %v393, 4294901760
        %v717 = vsub.f32 %v393, %v716
        %718 = vmatmul.f32.gmra.mxu0 %v717
        %v719 = vpop.f32.mrf.mxu0
        %v720 = vadd.f32 %v629, %v719
        %v721 = vand.u32 %v396, 4294901760
        %v722 = vsub.f32 %v396, %v721
        %723 = vmatmul.f32.gmra.mxu0 %v722
        %v724 = vpop.f32.mrf.mxu0
        %v725 = vadd.f32 %v633, %v724
        %v726 = vand.u32 %v399, 4294901760
        %v727 = vsub.f32 %v399, %v726
        %728 = vmatmul.f32.gmra.mxu0 %v727
        %v729 = vpop.f32.mrf.mxu0
        %v730 = vadd.f32 %v637, %v729
        %v731 = vand.u32 %v402, 4294901760
        %v732 = vsub.f32 %v402, %v731
        %733 = vmatmul.f32.gmra.mxu0 %v732
        %v734 = vpop.f32.mrf.mxu0
        %v735 = vadd.f32 %v641, %v734
        %v736 = vand.u32 %v405, 4294901760
        %v737 = vsub.f32 %v405, %v736
        %738 = vmatmul.f32.gmra.mxu0 %v737
        %v739 = vpop.f32.mrf.mxu0
        %v740 = vadd.f32 %v645, %v739
        %v741 = vand.u32 %v408, 4294901760
        %v742 = vsub.f32 %v408, %v741
        %743 = vmatmul.f32.gmra.mxu0 %v742
        %v744 = vpop.f32.mrf.mxu0
        %v745 = vadd.f32 %v649, %v744
        %v746 = vand.u32 %v411, 4294901760
        %v747 = vsub.f32 %v411, %v746
        %748 = vmatmul.f32.gmra.mxu0 %v747
        %v749 = vpop.f32.mrf.mxu0
        %v750 = vadd.f32 %v653, %v749
        %v751 = vand.u32 %v414, 4294901760
        %v752 = vsub.f32 %v414, %v751
        %753 = vmatmul.f32.gmra.mxu0 %v752
        %v754 = vpop.f32.mrf.mxu0
        %v755 = vadd.f32 %v657, %v754
        %v756 = vand.u32 %v417, 4294901760
        %v757 = vsub.f32 %v417, %v756
        %758 = vmatmul.f32.gmra.mxu0 %v757
        %v759 = vpop.f32.mrf.mxu0
        %v760 = vadd.f32 %v661, %v759
        %v761 = vand.u32 %v420, 4294901760
        %v762 = vsub.f32 %v420, %v761
        %763 = vmatmul.f32.gmra.mxu0 %v762
        %v764 = vpop.f32.mrf.mxu0
        %v765 = vadd.f32 %v665, %v764
        %v766 = vand.u32 %v423, 4294901760
        %v767 = vsub.f32 %v423, %v766
        %768 = vmatmul.f32.gmra.mxu0 %v767
        %v769 = vpop.f32.mrf.mxu0
        %v770 = vadd.f32 %v669, %v769
        %v771 = vand.u32 %v426, 4294901760
        %v772 = vsub.f32 %v426, %v771
        %773 = vmatmul.f32.gmra.mxu0 %v772
        %v774 = vpop.f32.mrf.mxu0
        %v775 = vadd.f32 %v673, %v774
        %v776 = vand.u32 %v429, 4294901760
        %v777 = vsub.f32 %v429, %v776
        %778 = vmatmul.f32.gmra.mxu0 %v777
        %v779 = vpop.f32.mrf.mxu0
        %v780 = vadd.f32 %v677, %v779
        %v781 = vand.u32 %v432, 4294901760
        %v782 = vsub.f32 %v432, %v781
        %783 = vmatmul.f32.gmra.mxu0 %v782
        %v784 = vpop.f32.mrf.mxu0
        %v785 = vadd.f32 %v681, %v784
        %v786 = vand.u32 %v435, 4294901760
        %v787 = vsub.f32 %v435, %v786
        %788 = vmatmul.f32.gmra.mxu0 %v787
        %v789 = vpop.f32.mrf.mxu0
        %v790 = vadd.f32 %v685, %v789
        %791 = vdwg.mxu0
        %792 = vmatpush.msra.mxu0 0.0
        %793 = vmatpush.msra.mxu0 0.0
        %794 = vmatpush.msra.mxu0 0.0
        %795 = vmatpush.msra.mxu0 0.0
        %796 = vmatpush.msra.mxu0 0.0
        %797 = vmatpush.msra.mxu0 0.0
        %798 = vmatpush.msra.mxu0 0.0
        %799 = vmatpush.msra.mxu0 0.0
        %800 = vmatpush.msra.mxu0 0.0
        %801 = vmatpush.msra.mxu0 0.0
        %802 = vmatpush.msra.mxu0 0.0
        %803 = vmatpush.msra.mxu0 0.0
        %v804 = vand.u32 %v274, 4294901760
        %805 = vmatpush.msra.mxu0 %v804
        %v806 = vand.u32 %v272, 4294901760
        %807 = vmatpush.msra.mxu0 %v806
        %v808 = vand.u32 %v270, 4294901760
        %809 = vmatpush.msra.mxu0 %v808
        %v810 = vand.u32 %v268, 4294901760
        %811 = vmatpush.msra.mxu0 %v810
        %v812 = vand.u32 %v390, 4294901760
        %v813 = vsub.f32 %v390, %v812
        %v814 = vand.u32 %v813, 4294901760
        %815 = vmatmul.f32.gmra.mxu0 %v814
        %v816 = vpop.f32.mrf.mxu0
        %v817 = vadd.f32 %v715, %v816
        %v818 = vand.u32 %v393, 4294901760
        %v819 = vsub.f32 %v393, %v818
        %v820 = vand.u32 %v819, 4294901760
        %821 = vmatmul.f32.gmra.mxu0 %v820
        %v822 = vpop.f32.mrf.mxu0
        %v823 = vadd.f32 %v720, %v822
        %v824 = vand.u32 %v396, 4294901760
        %v825 = vsub.f32 %v396, %v824
        %v826 = vand.u32 %v825, 4294901760
        %827 = vmatmul.f32.gmra.mxu0 %v826
        %v828 = vpop.f32.mrf.mxu0
        %v829 = vadd.f32 %v725, %v828
        %v830 = vand.u32 %v399, 4294901760
        %v831 = vsub.f32 %v399, %v830
        %v832 = vand.u32 %v831, 4294901760
        %833 = vmatmul.f32.gmra.mxu0 %v832
        %v834 = vpop.f32.mrf.mxu0
        %v835 = vadd.f32 %v730, %v834
        %v836 = vand.u32 %v402, 4294901760
        %v837 = vsub.f32 %v402, %v836
        %v838 = vand.u32 %v837, 4294901760
        %839 = vmatmul.f32.gmra.mxu0 %v838
        %v840 = vpop.f32.mrf.mxu0
        %v841 = vadd.f32 %v735, %v840
        %v842 = vand.u32 %v405, 4294901760
        %v843 = vsub.f32 %v405, %v842
        %v844 = vand.u32 %v843, 4294901760
        %845 = vmatmul.f32.gmra.mxu0 %v844
        %v846 = vpop.f32.mrf.mxu0
        %v847 = vadd.f32 %v740, %v846
        %v848 = vand.u32 %v408, 4294901760
        %v849 = vsub.f32 %v408, %v848
        %v850 = vand.u32 %v849, 4294901760
        %851 = vmatmul.f32.gmra.mxu0 %v850
        %v852 = vpop.f32.mrf.mxu0
        %v853 = vadd.f32 %v745, %v852
        %v854 = vand.u32 %v411, 4294901760
        %v855 = vsub.f32 %v411, %v854
        %v856 = vand.u32 %v855, 4294901760
        %857 = vmatmul.f32.gmra.mxu0 %v856
        %v858 = vpop.f32.mrf.mxu0
        %v859 = vadd.f32 %v750, %v858
        %v860 = vand.u32 %v414, 4294901760
        %v861 = vsub.f32 %v414, %v860
        %v862 = vand.u32 %v861, 4294901760
        %863 = vmatmul.f32.gmra.mxu0 %v862
        %v864 = vpop.f32.mrf.mxu0
        %v865 = vadd.f32 %v755, %v864
        %v866 = vand.u32 %v417, 4294901760
        %v867 = vsub.f32 %v417, %v866
        %v868 = vand.u32 %v867, 4294901760
        %869 = vmatmul.f32.gmra.mxu0 %v868
        %v870 = vpop.f32.mrf.mxu0
        %v871 = vadd.f32 %v760, %v870
        %v872 = vand.u32 %v420, 4294901760
        %v873 = vsub.f32 %v420, %v872
        %v874 = vand.u32 %v873, 4294901760
        %875 = vmatmul.f32.gmra.mxu0 %v874
        %v876 = vpop.f32.mrf.mxu0
        %v877 = vadd.f32 %v765, %v876
        %v878 = vand.u32 %v423, 4294901760
        %v879 = vsub.f32 %v423, %v878
        %v880 = vand.u32 %v879, 4294901760
        %881 = vmatmul.f32.gmra.mxu0 %v880
        %v882 = vpop.f32.mrf.mxu0
        %v883 = vadd.f32 %v770, %v882
        %v884 = vand.u32 %v426, 4294901760
        %v885 = vsub.f32 %v426, %v884
        %v886 = vand.u32 %v885, 4294901760
        %887 = vmatmul.f32.gmra.mxu0 %v886
        %v888 = vpop.f32.mrf.mxu0
        %v889 = vadd.f32 %v775, %v888
        %v890 = vand.u32 %v429, 4294901760
        %v891 = vsub.f32 %v429, %v890
        %v892 = vand.u32 %v891, 4294901760
        %893 = vmatmul.f32.gmra.mxu0 %v892
        %v894 = vpop.f32.mrf.mxu0
        %v895 = vadd.f32 %v780, %v894
        %v896 = vand.u32 %v432, 4294901760
        %v897 = vsub.f32 %v432, %v896
        %v898 = vand.u32 %v897, 4294901760
        %899 = vmatmul.f32.gmra.mxu0 %v898
        %v900 = vpop.f32.mrf.mxu0
        %v901 = vadd.f32 %v785, %v900
        %v902 = vand.u32 %v435, 4294901760
        %v903 = vsub.f32 %v435, %v902
        %v904 = vand.u32 %v903, 4294901760
        %905 = vmatmul.f32.gmra.mxu0 %v904
        %v906 = vpop.f32.mrf.mxu0
        %v907 = vadd.f32 %v790, %v906
        %908 = vdwg.mxu0
        %909 = vmatpush.msra.mxu0 0.0
        %910 = vmatpush.msra.mxu0 0.0
        %911 = vmatpush.msra.mxu0 0.0
        %912 = vmatpush.msra.mxu0 0.0
        %913 = vmatpush.msra.mxu0 0.0
        %914 = vmatpush.msra.mxu0 0.0
        %915 = vmatpush.msra.mxu0 0.0
        %916 = vmatpush.msra.mxu0 0.0
        %917 = vmatpush.msra.mxu0 0.0
        %918 = vmatpush.msra.mxu0 0.0
        %919 = vmatpush.msra.mxu0 0.0
        %920 = vmatpush.msra.mxu0 0.0
        %v921 = vand.u32 %v274, 4294901760
        %v922 = vsub.f32 %v274, %v921
        %v923 = vand.u32 %v922, 4294901760
        %924 = vmatpush.msra.mxu0 %v923
        %v925 = vand.u32 %v272, 4294901760
        %v926 = vsub.f32 %v272, %v925
        %v927 = vand.u32 %v926, 4294901760
        %928 = vmatpush.msra.mxu0 %v927
        %v929 = vand.u32 %v270, 4294901760
        %v930 = vsub.f32 %v270, %v929
        %v931 = vand.u32 %v930, 4294901760
        %932 = vmatpush.msra.mxu0 %v931
        %v933 = vand.u32 %v268, 4294901760
        %v934 = vsub.f32 %v268, %v933
        %v935 = vand.u32 %v934, 4294901760
        %936 = vmatpush.msra.mxu0 %v935
        %v937 = vand.u32 %v390, 4294901760
        %938 = vmatmul.f32.gmra.mxu0 %v937
        %v939 = vpop.f32.mrf.mxu0
        %v940 = vadd.f32 %v817, %v939
        %v941 = vand.u32 %v393, 4294901760
        %942 = vmatmul.f32.gmra.mxu0 %v941
        %v943 = vpop.f32.mrf.mxu0
        %v944 = vadd.f32 %v823, %v943
        %v945 = vand.u32 %v396, 4294901760
        %946 = vmatmul.f32.gmra.mxu0 %v945
        %v947 = vpop.f32.mrf.mxu0
        %v948 = vadd.f32 %v829, %v947
        %v949 = vand.u32 %v399, 4294901760
        %950 = vmatmul.f32.gmra.mxu0 %v949
        %v951 = vpop.f32.mrf.mxu0
        %v952 = vadd.f32 %v835, %v951
        %v953 = vand.u32 %v402, 4294901760
        %954 = vmatmul.f32.gmra.mxu0 %v953
        %v955 = vpop.f32.mrf.mxu0
        %v956 = vadd.f32 %v841, %v955
        %v957 = vand.u32 %v405, 4294901760
        %958 = vmatmul.f32.gmra.mxu0 %v957
        %v959 = vpop.f32.mrf.mxu0
        %v960 = vadd.f32 %v847, %v959
        %v961 = vand.u32 %v408, 4294901760
        %962 = vmatmul.f32.gmra.mxu0 %v961
        %v963 = vpop.f32.mrf.mxu0
        %v964 = vadd.f32 %v853, %v963
        %v965 = vand.u32 %v411, 4294901760
        %966 = vmatmul.f32.gmra.mxu0 %v965
        %v967 = vpop.f32.mrf.mxu0
        %v968 = vadd.f32 %v859, %v967
        %v969 = vand.u32 %v414, 4294901760
        %970 = vmatmul.f32.gmra.mxu0 %v969
        %v971 = vpop.f32.mrf.mxu0
        %v972 = vadd.f32 %v865, %v971
        %v973 = vand.u32 %v417, 4294901760
        %974 = vmatmul.f32.gmra.mxu0 %v973
        %v975 = vpop.f32.mrf.mxu0
        %v976 = vadd.f32 %v871, %v975
        %v977 = vand.u32 %v420, 4294901760
        %978 = vmatmul.f32.gmra.mxu0 %v977
        %v979 = vpop.f32.mrf.mxu0
        %v980 = vadd.f32 %v877, %v979
        %v981 = vand.u32 %v423, 4294901760
        %982 = vmatmul.f32.gmra.mxu0 %v981
        %v983 = vpop.f32.mrf.mxu0
        %v984 = vadd.f32 %v883, %v983
        %v985 = vand.u32 %v426, 4294901760
        %986 = vmatmul.f32.gmra.mxu0 %v985
        %v987 = vpop.f32.mrf.mxu0
        %v988 = vadd.f32 %v889, %v987
        %v989 = vand.u32 %v429, 4294901760
        %990 = vmatmul.f32.gmra.mxu0 %v989
        %v991 = vpop.f32.mrf.mxu0
        %v992 = vadd.f32 %v895, %v991
        %v993 = vand.u32 %v432, 4294901760
        %994 = vmatmul.f32.gmra.mxu0 %v993
        %v995 = vpop.f32.mrf.mxu0
        %v996 = vadd.f32 %v901, %v995
        %v997 = vand.u32 %v435, 4294901760
        %998 = vmatmul.f32.gmra.mxu0 %v997
        %v999 = vpop.f32.mrf.mxu0
        %v1000 = vadd.f32 %v907, %v999
        %1001 = vdwg.mxu0
        %1002 = vmatpush.msra.mxu0 0.0
        %1003 = vmatpush.msra.mxu0 0.0
        %1004 = vmatpush.msra.mxu0 0.0
        %1005 = vmatpush.msra.mxu0 0.0
        %1006 = vmatpush.msra.mxu0 0.0
        %1007 = vmatpush.msra.mxu0 0.0
        %1008 = vmatpush.msra.mxu0 0.0
        %1009 = vmatpush.msra.mxu0 0.0
        %1010 = vmatpush.msra.mxu0 0.0
        %1011 = vmatpush.msra.mxu0 0.0
        %1012 = vmatpush.msra.mxu0 0.0
        %1013 = vmatpush.msra.mxu0 0.0
        %v1014 = vand.u32 %v274, 4294901760
        %1015 = vmatpush.msra.mxu0 %v1014
        %v1016 = vand.u32 %v272, 4294901760
        %1017 = vmatpush.msra.mxu0 %v1016
        %v1018 = vand.u32 %v270, 4294901760
        %1019 = vmatpush.msra.mxu0 %v1018
        %v1020 = vand.u32 %v268, 4294901760
        %1021 = vmatpush.msra.mxu0 %v1020
        %v1022 = vand.u32 %v390, 4294901760
        %1023 = vmatmul.f32.gmra.mxu0 %v1022
        %v1024 = vpop.f32.mrf.mxu0
        %v1025 = vadd.f32 %v940, %v1024
        %v1026 = vand.u32 %v393, 4294901760
        %1027 = vmatmul.f32.gmra.mxu0 %v1026
        %v1028 = vpop.f32.mrf.mxu0
        %v1029 = vadd.f32 %v944, %v1028
        %v1030 = vand.u32 %v396, 4294901760
        %1031 = vmatmul.f32.gmra.mxu0 %v1030
        %v1032 = vpop.f32.mrf.mxu0
        %v1033 = vadd.f32 %v948, %v1032
        %v1034 = vand.u32 %v399, 4294901760
        %1035 = vmatmul.f32.gmra.mxu0 %v1034
        %v1036 = vpop.f32.mrf.mxu0
        %v1037 = vadd.f32 %v952, %v1036
        %v1038 = vand.u32 %v402, 4294901760
        %1039 = vmatmul.f32.gmra.mxu0 %v1038
        %v1040 = vpop.f32.mrf.mxu0
        %v1041 = vadd.f32 %v956, %v1040
        %v1042 = vand.u32 %v405, 4294901760
        %1043 = vmatmul.f32.gmra.mxu0 %v1042
        %v1044 = vpop.f32.mrf.mxu0
        %v1045 = vadd.f32 %v960, %v1044
        %v1046 = vand.u32 %v408, 4294901760
        %1047 = vmatmul.f32.gmra.mxu0 %v1046
        %v1048 = vpop.f32.mrf.mxu0
        %v1049 = vadd.f32 %v964, %v1048
        %v1050 = vand.u32 %v411, 4294901760
        %1051 = vmatmul.f32.gmra.mxu0 %v1050
        %v1052 = vpop.f32.mrf.mxu0
        %v1053 = vadd.f32 %v968, %v1052
        %v1054 = vand.u32 %v414, 4294901760
        %1055 = vmatmul.f32.gmra.mxu0 %v1054
        %v1056 = vpop.f32.mrf.mxu0
        %v1057 = vadd.f32 %v972, %v1056
        %v1058 = vand.u32 %v417, 4294901760
        %1059 = vmatmul.f32.gmra.mxu0 %v1058
        %v1060 = vpop.f32.mrf.mxu0
        %v1061 = vadd.f32 %v976, %v1060
        %v1062 = vand.u32 %v420, 4294901760
        %1063 = vmatmul.f32.gmra.mxu0 %v1062
        %v1064 = vpop.f32.mrf.mxu0
        %v1065 = vadd.f32 %v980, %v1064
        %v1066 = vand.u32 %v423, 4294901760
        %1067 = vmatmul.f32.gmra.mxu0 %v1066
        %v1068 = vpop.f32.mrf.mxu0
        %v1069 = vadd.f32 %v984, %v1068
        %v1070 = vand.u32 %v426, 4294901760
        %1071 = vmatmul.f32.gmra.mxu0 %v1070
        %v1072 = vpop.f32.mrf.mxu0
        %v1073 = vadd.f32 %v988, %v1072
        %v1074 = vand.u32 %v429, 4294901760
        %1075 = vmatmul.f32.gmra.mxu0 %v1074
        %v1076 = vpop.f32.mrf.mxu0
        %v1077 = vadd.f32 %v992, %v1076
        %v1078 = vand.u32 %v432, 4294901760
        %1079 = vmatmul.f32.gmra.mxu0 %v1078
        %v1080 = vpop.f32.mrf.mxu0
        %v1081 = vadd.f32 %v996, %v1080
        %v1082 = vand.u32 %v435, 4294901760
        %1083 = vmatmul.f32.gmra.mxu0 %v1082
        %v1084 = vpop.f32.mrf.mxu0
        %v1085 = vadd.f32 %v1000, %v1084
        %1086 = vdwg.mxu0
        %1087 = vmatpush.msra.mxu0 0.0
        %1088 = vmatpush.msra.mxu0 0.0
        %1089 = vmatpush.msra.mxu0 0.0
        %1090 = vmatpush.msra.mxu0 0.0
        %1091 = vmatpush.msra.mxu0 0.0
        %1092 = vmatpush.msra.mxu0 0.0
        %1093 = vmatpush.msra.mxu0 0.0
        %1094 = vmatpush.msra.mxu0 0.0
        %1095 = vmatpush.msra.mxu0 0.0
        %1096 = vmatpush.msra.mxu0 0.0
        %1097 = vmatpush.msra.mxu0 0.0
        %1098 = vmatpush.msra.mxu0 0.0
        %v1099 = vand.u32 %v275, 4294901760
        %1100 = vmatpush.msra.mxu0 %v1099
        %v1101 = vand.u32 %v273, 4294901760
        %1102 = vmatpush.msra.mxu0 %v1101
        %v1103 = vand.u32 %v271, 4294901760
        %1104 = vmatpush.msra.mxu0 %v1103
        %v1105 = vand.u32 %v269, 4294901760
        %1106 = vmatpush.msra.mxu0 %v1105
        %v1107 = vand.u32 %v390, 4294901760
        %v1108 = vsub.f32 %v390, %v1107
        %v1109 = vand.u32 %v1108, 4294901760
        %v1110 = vsub.f32 %v1108, %v1109
        %v1111 = vand.u32 %v1110, 4294901760
        %1112 = vmatmul.f32.gmra.mxu0 %v1111
        %v1113 = vpop.f32.mrf.mxu0
        %v1114 = vadd.f32 %v311, %v1113
        %v1115 = vand.u32 %v393, 4294901760
        %v1116 = vsub.f32 %v393, %v1115
        %v1117 = vand.u32 %v1116, 4294901760
        %v1118 = vsub.f32 %v1116, %v1117
        %v1119 = vand.u32 %v1118, 4294901760
        %1120 = vmatmul.f32.gmra.mxu0 %v1119
        %v1121 = vpop.f32.mrf.mxu0
        %v1122 = vadd.f32 %v316, %v1121
        %v1123 = vand.u32 %v396, 4294901760
        %v1124 = vsub.f32 %v396, %v1123
        %v1125 = vand.u32 %v1124, 4294901760
        %v1126 = vsub.f32 %v1124, %v1125
        %v1127 = vand.u32 %v1126, 4294901760
        %1128 = vmatmul.f32.gmra.mxu0 %v1127
        %v1129 = vpop.f32.mrf.mxu0
        %v1130 = vadd.f32 %v321, %v1129
        %v1131 = vand.u32 %v399, 4294901760
        %v1132 = vsub.f32 %v399, %v1131
        %v1133 = vand.u32 %v1132, 4294901760
        %v1134 = vsub.f32 %v1132, %v1133
        %v1135 = vand.u32 %v1134, 4294901760
        %1136 = vmatmul.f32.gmra.mxu0 %v1135
        %v1137 = vpop.f32.mrf.mxu0
        %v1138 = vadd.f32 %v326, %v1137
        %v1139 = vand.u32 %v402, 4294901760
        %v1140 = vsub.f32 %v402, %v1139
        %v1141 = vand.u32 %v1140, 4294901760
        %v1142 = vsub.f32 %v1140, %v1141
        %v1143 = vand.u32 %v1142, 4294901760
        %1144 = vmatmul.f32.gmra.mxu0 %v1143
        %v1145 = vpop.f32.mrf.mxu0
        %v1146 = vadd.f32 %v331, %v1145
        %v1147 = vand.u32 %v405, 4294901760
        %v1148 = vsub.f32 %v405, %v1147
        %v1149 = vand.u32 %v1148, 4294901760
        %v1150 = vsub.f32 %v1148, %v1149
        %v1151 = vand.u32 %v1150, 4294901760
        %1152 = vmatmul.f32.gmra.mxu0 %v1151
        %v1153 = vpop.f32.mrf.mxu0
        %v1154 = vadd.f32 %v336, %v1153
        %v1155 = vand.u32 %v408, 4294901760
        %v1156 = vsub.f32 %v408, %v1155
        %v1157 = vand.u32 %v1156, 4294901760
        %v1158 = vsub.f32 %v1156, %v1157
        %v1159 = vand.u32 %v1158, 4294901760
        %1160 = vmatmul.f32.gmra.mxu0 %v1159
        %v1161 = vpop.f32.mrf.mxu0
        %v1162 = vadd.f32 %v341, %v1161
        %v1163 = vand.u32 %v411, 4294901760
        %v1164 = vsub.f32 %v411, %v1163
        %v1165 = vand.u32 %v1164, 4294901760
        %v1166 = vsub.f32 %v1164, %v1165
        %v1167 = vand.u32 %v1166, 4294901760
        %1168 = vmatmul.f32.gmra.mxu0 %v1167
        %v1169 = vpop.f32.mrf.mxu0
        %v1170 = vadd.f32 %v346, %v1169
        %v1171 = vand.u32 %v414, 4294901760
        %v1172 = vsub.f32 %v414, %v1171
        %v1173 = vand.u32 %v1172, 4294901760
        %v1174 = vsub.f32 %v1172, %v1173
        %v1175 = vand.u32 %v1174, 4294901760
        %1176 = vmatmul.f32.gmra.mxu0 %v1175
        %v1177 = vpop.f32.mrf.mxu0
        %v1178 = vadd.f32 %v351, %v1177
        %v1179 = vand.u32 %v417, 4294901760
        %v1180 = vsub.f32 %v417, %v1179
        %v1181 = vand.u32 %v1180, 4294901760
        %v1182 = vsub.f32 %v1180, %v1181
        %v1183 = vand.u32 %v1182, 4294901760
        %1184 = vmatmul.f32.gmra.mxu0 %v1183
        %v1185 = vpop.f32.mrf.mxu0
        %v1186 = vadd.f32 %v356, %v1185
        %v1187 = vand.u32 %v420, 4294901760
        %v1188 = vsub.f32 %v420, %v1187
        %v1189 = vand.u32 %v1188, 4294901760
        %v1190 = vsub.f32 %v1188, %v1189
        %v1191 = vand.u32 %v1190, 4294901760
        %1192 = vmatmul.f32.gmra.mxu0 %v1191
        %v1193 = vpop.f32.mrf.mxu0
        %v1194 = vadd.f32 %v361, %v1193
        %v1195 = vand.u32 %v423, 4294901760
        %v1196 = vsub.f32 %v423, %v1195
        %v1197 = vand.u32 %v1196, 4294901760
        %v1198 = vsub.f32 %v1196, %v1197
        %v1199 = vand.u32 %v1198, 4294901760
        %1200 = vmatmul.f32.gmra.mxu0 %v1199
        %v1201 = vpop.f32.mrf.mxu0
        %v1202 = vadd.f32 %v366, %v1201
        %v1203 = vand.u32 %v426, 4294901760
        %v1204 = vsub.f32 %v426, %v1203
        %v1205 = vand.u32 %v1204, 4294901760
        %v1206 = vsub.f32 %v1204, %v1205
        %v1207 = vand.u32 %v1206, 4294901760
        %1208 = vmatmul.f32.gmra.mxu0 %v1207
        %v1209 = vpop.f32.mrf.mxu0
        %v1210 = vadd.f32 %v371, %v1209
        %v1211 = vand.u32 %v429, 4294901760
        %v1212 = vsub.f32 %v429, %v1211
        %v1213 = vand.u32 %v1212, 4294901760
        %v1214 = vsub.f32 %v1212, %v1213
        %v1215 = vand.u32 %v1214, 4294901760
        %1216 = vmatmul.f32.gmra.mxu0 %v1215
        %v1217 = vpop.f32.mrf.mxu0
        %v1218 = vadd.f32 %v376, %v1217
        %v1219 = vand.u32 %v432, 4294901760
        %v1220 = vsub.f32 %v432, %v1219
        %v1221 = vand.u32 %v1220, 4294901760
        %v1222 = vsub.f32 %v1220, %v1221
        %v1223 = vand.u32 %v1222, 4294901760
        %1224 = vmatmul.f32.gmra.mxu0 %v1223
        %v1225 = vpop.f32.mrf.mxu0
        %v1226 = vadd.f32 %v381, %v1225
        %v1227 = vand.u32 %v435, 4294901760
        %v1228 = vsub.f32 %v435, %v1227
        %v1229 = vand.u32 %v1228, 4294901760
        %v1230 = vsub.f32 %v1228, %v1229
        %v1231 = vand.u32 %v1230, 4294901760
        %1232 = vmatmul.f32.gmra.mxu0 %v1231
        %v1233 = vpop.f32.mrf.mxu0
        %v1234 = vadd.f32 %v386, %v1233
        %1235 = vdwg.mxu0
        %1236 = vmatpush.msra.mxu0 0.0
        %1237 = vmatpush.msra.mxu0 0.0
        %1238 = vmatpush.msra.mxu0 0.0
        %1239 = vmatpush.msra.mxu0 0.0
        %1240 = vmatpush.msra.mxu0 0.0
        %1241 = vmatpush.msra.mxu0 0.0
        %1242 = vmatpush.msra.mxu0 0.0
        %1243 = vmatpush.msra.mxu0 0.0
        %1244 = vmatpush.msra.mxu0 0.0
        %1245 = vmatpush.msra.mxu0 0.0
        %1246 = vmatpush.msra.mxu0 0.0
        %1247 = vmatpush.msra.mxu0 0.0
        %v1248 = vand.u32 %v275, 4294901760
        %v1249 = vsub.f32 %v275, %v1248
        %v1250 = vand.u32 %v1249, 4294901760
        %v1251 = vsub.f32 %v1249, %v1250
        %v1252 = vand.u32 %v1251, 4294901760
        %1253 = vmatpush.msra.mxu0 %v1252
        %v1254 = vand.u32 %v273, 4294901760
        %v1255 = vsub.f32 %v273, %v1254
        %v1256 = vand.u32 %v1255, 4294901760
        %v1257 = vsub.f32 %v1255, %v1256
        %v1258 = vand.u32 %v1257, 4294901760
        %1259 = vmatpush.msra.mxu0 %v1258
        %v1260 = vand.u32 %v271, 4294901760
        %v1261 = vsub.f32 %v271, %v1260
        %v1262 = vand.u32 %v1261, 4294901760
        %v1263 = vsub.f32 %v1261, %v1262
        %v1264 = vand.u32 %v1263, 4294901760
        %1265 = vmatpush.msra.mxu0 %v1264
        %v1266 = vand.u32 %v269, 4294901760
        %v1267 = vsub.f32 %v269, %v1266
        %v1268 = vand.u32 %v1267, 4294901760
        %v1269 = vsub.f32 %v1267, %v1268
        %v1270 = vand.u32 %v1269, 4294901760
        %1271 = vmatpush.msra.mxu0 %v1270
        %v1272 = vand.u32 %v390, 4294901760
        %1273 = vmatmul.f32.gmra.mxu0 %v1272
        %v1274 = vpop.f32.mrf.mxu0
        %v1275 = vadd.f32 %v1114, %v1274
        %v1276 = vand.u32 %v393, 4294901760
        %1277 = vmatmul.f32.gmra.mxu0 %v1276
        %v1278 = vpop.f32.mrf.mxu0
        %v1279 = vadd.f32 %v1122, %v1278
        %v1280 = vand.u32 %v396, 4294901760
        %1281 = vmatmul.f32.gmra.mxu0 %v1280
        %v1282 = vpop.f32.mrf.mxu0
        %v1283 = vadd.f32 %v1130, %v1282
        %v1284 = vand.u32 %v399, 4294901760
        %1285 = vmatmul.f32.gmra.mxu0 %v1284
        %v1286 = vpop.f32.mrf.mxu0
        %v1287 = vadd.f32 %v1138, %v1286
        %v1288 = vand.u32 %v402, 4294901760
        %1289 = vmatmul.f32.gmra.mxu0 %v1288
        %v1290 = vpop.f32.mrf.mxu0
        %v1291 = vadd.f32 %v1146, %v1290
        %v1292 = vand.u32 %v405, 4294901760
        %1293 = vmatmul.f32.gmra.mxu0 %v1292
        %v1294 = vpop.f32.mrf.mxu0
        %v1295 = vadd.f32 %v1154, %v1294
        %v1296 = vand.u32 %v408, 4294901760
        %1297 = vmatmul.f32.gmra.mxu0 %v1296
        %v1298 = vpop.f32.mrf.mxu0
        %v1299 = vadd.f32 %v1162, %v1298
        %v1300 = vand.u32 %v411, 4294901760
        %1301 = vmatmul.f32.gmra.mxu0 %v1300
        %v1302 = vpop.f32.mrf.mxu0
        %v1303 = vadd.f32 %v1170, %v1302
        %v1304 = vand.u32 %v414, 4294901760
        %1305 = vmatmul.f32.gmra.mxu0 %v1304
        %v1306 = vpop.f32.mrf.mxu0
        %v1307 = vadd.f32 %v1178, %v1306
        %v1308 = vand.u32 %v417, 4294901760
        %1309 = vmatmul.f32.gmra.mxu0 %v1308
        %v1310 = vpop.f32.mrf.mxu0
        %v1311 = vadd.f32 %v1186, %v1310
        %v1312 = vand.u32 %v420, 4294901760
        %1313 = vmatmul.f32.gmra.mxu0 %v1312
        %v1314 = vpop.f32.mrf.mxu0
        %v1315 = vadd.f32 %v1194, %v1314
        %v1316 = vand.u32 %v423, 4294901760
        %1317 = vmatmul.f32.gmra.mxu0 %v1316
        %v1318 = vpop.f32.mrf.mxu0
        %v1319 = vadd.f32 %v1202, %v1318
        %v1320 = vand.u32 %v426, 4294901760
        %1321 = vmatmul.f32.gmra.mxu0 %v1320
        %v1322 = vpop.f32.mrf.mxu0
        %v1323 = vadd.f32 %v1210, %v1322
        %v1324 = vand.u32 %v429, 4294901760
        %1325 = vmatmul.f32.gmra.mxu0 %v1324
        %v1326 = vpop.f32.mrf.mxu0
        %v1327 = vadd.f32 %v1218, %v1326
        %v1328 = vand.u32 %v432, 4294901760
        %1329 = vmatmul.f32.gmra.mxu0 %v1328
        %v1330 = vpop.f32.mrf.mxu0
        %v1331 = vadd.f32 %v1226, %v1330
        %v1332 = vand.u32 %v435, 4294901760
        %1333 = vmatmul.f32.gmra.mxu0 %v1332
        %v1334 = vpop.f32.mrf.mxu0
        %v1335 = vadd.f32 %v1234, %v1334
        %1336 = vdwg.mxu0
        %1337 = vmatpush.msra.mxu0 0.0
        %1338 = vmatpush.msra.mxu0 0.0
        %1339 = vmatpush.msra.mxu0 0.0
        %1340 = vmatpush.msra.mxu0 0.0
        %1341 = vmatpush.msra.mxu0 0.0
        %1342 = vmatpush.msra.mxu0 0.0
        %1343 = vmatpush.msra.mxu0 0.0
        %1344 = vmatpush.msra.mxu0 0.0
        %1345 = vmatpush.msra.mxu0 0.0
        %1346 = vmatpush.msra.mxu0 0.0
        %1347 = vmatpush.msra.mxu0 0.0
        %1348 = vmatpush.msra.mxu0 0.0
        %v1349 = vand.u32 %v275, 4294901760
        %v1350 = vsub.f32 %v275, %v1349
        %1351 = vmatpush.msra.mxu0 %v1350
        %v1352 = vand.u32 %v273, 4294901760
        %v1353 = vsub.f32 %v273, %v1352
        %1354 = vmatpush.msra.mxu0 %v1353
        %v1355 = vand.u32 %v271, 4294901760
        %v1356 = vsub.f32 %v271, %v1355
        %1357 = vmatpush.msra.mxu0 %v1356
        %v1358 = vand.u32 %v269, 4294901760
        %v1359 = vsub.f32 %v269, %v1358
        %1360 = vmatpush.msra.mxu0 %v1359
        %v1361 = vand.u32 %v390, 4294901760
        %v1362 = vsub.f32 %v390, %v1361
        %1363 = vmatmul.f32.gmra.mxu0 %v1362
        %v1364 = vpop.f32.mrf.mxu0
        %v1365 = vadd.f32 %v1275, %v1364
        %v1366 = vand.u32 %v393, 4294901760
        %v1367 = vsub.f32 %v393, %v1366
        %1368 = vmatmul.f32.gmra.mxu0 %v1367
        %v1369 = vpop.f32.mrf.mxu0
        %v1370 = vadd.f32 %v1279, %v1369
        %v1371 = vand.u32 %v396, 4294901760
        %v1372 = vsub.f32 %v396, %v1371
        %1373 = vmatmul.f32.gmra.mxu0 %v1372
        %v1374 = vpop.f32.mrf.mxu0
        %v1375 = vadd.f32 %v1283, %v1374
        %v1376 = vand.u32 %v399, 4294901760
        %v1377 = vsub.f32 %v399, %v1376
        %1378 = vmatmul.f32.gmra.mxu0 %v1377
        %v1379 = vpop.f32.mrf.mxu0
        %v1380 = vadd.f32 %v1287, %v1379
        %v1381 = vand.u32 %v402, 4294901760
        %v1382 = vsub.f32 %v402, %v1381
        %1383 = vmatmul.f32.gmra.mxu0 %v1382
        %v1384 = vpop.f32.mrf.mxu0
        %v1385 = vadd.f32 %v1291, %v1384
        %v1386 = vand.u32 %v405, 4294901760
        %v1387 = vsub.f32 %v405, %v1386
        %1388 = vmatmul.f32.gmra.mxu0 %v1387
        %v1389 = vpop.f32.mrf.mxu0
        %v1390 = vadd.f32 %v1295, %v1389
        %v1391 = vand.u32 %v408, 4294901760
        %v1392 = vsub.f32 %v408, %v1391
        %1393 = vmatmul.f32.gmra.mxu0 %v1392
        %v1394 = vpop.f32.mrf.mxu0
        %v1395 = vadd.f32 %v1299, %v1394
        %v1396 = vand.u32 %v411, 4294901760
        %v1397 = vsub.f32 %v411, %v1396
        %1398 = vmatmul.f32.gmra.mxu0 %v1397
        %v1399 = vpop.f32.mrf.mxu0
        %v1400 = vadd.f32 %v1303, %v1399
        %v1401 = vand.u32 %v414, 4294901760
        %v1402 = vsub.f32 %v414, %v1401
        %1403 = vmatmul.f32.gmra.mxu0 %v1402
        %v1404 = vpop.f32.mrf.mxu0
        %v1405 = vadd.f32 %v1307, %v1404
        %v1406 = vand.u32 %v417, 4294901760
        %v1407 = vsub.f32 %v417, %v1406
        %1408 = vmatmul.f32.gmra.mxu0 %v1407
        %v1409 = vpop.f32.mrf.mxu0
        %v1410 = vadd.f32 %v1311, %v1409
        %v1411 = vand.u32 %v420, 4294901760
        %v1412 = vsub.f32 %v420, %v1411
        %1413 = vmatmul.f32.gmra.mxu0 %v1412
        %v1414 = vpop.f32.mrf.mxu0
        %v1415 = vadd.f32 %v1315, %v1414
        %v1416 = vand.u32 %v423, 4294901760
        %v1417 = vsub.f32 %v423, %v1416
        %1418 = vmatmul.f32.gmra.mxu0 %v1417
        %v1419 = vpop.f32.mrf.mxu0
        %v1420 = vadd.f32 %v1319, %v1419
        %v1421 = vand.u32 %v426, 4294901760
        %v1422 = vsub.f32 %v426, %v1421
        %1423 = vmatmul.f32.gmra.mxu0 %v1422
        %v1424 = vpop.f32.mrf.mxu0
        %v1425 = vadd.f32 %v1323, %v1424
        %v1426 = vand.u32 %v429, 4294901760
        %v1427 = vsub.f32 %v429, %v1426
        %1428 = vmatmul.f32.gmra.mxu0 %v1427
        %v1429 = vpop.f32.mrf.mxu0
        %v1430 = vadd.f32 %v1327, %v1429
        %v1431 = vand.u32 %v432, 4294901760
        %v1432 = vsub.f32 %v432, %v1431
        %1433 = vmatmul.f32.gmra.mxu0 %v1432
        %v1434 = vpop.f32.mrf.mxu0
        %v1435 = vadd.f32 %v1331, %v1434
        %v1436 = vand.u32 %v435, 4294901760
        %v1437 = vsub.f32 %v435, %v1436
        %1438 = vmatmul.f32.gmra.mxu0 %v1437
        %v1439 = vpop.f32.mrf.mxu0
        %v1440 = vadd.f32 %v1335, %v1439
        %1441 = vdwg.mxu0
        %1442 = vmatpush.msra.mxu0 0.0
        %1443 = vmatpush.msra.mxu0 0.0
        %1444 = vmatpush.msra.mxu0 0.0
        %1445 = vmatpush.msra.mxu0 0.0
        %1446 = vmatpush.msra.mxu0 0.0
        %1447 = vmatpush.msra.mxu0 0.0
        %1448 = vmatpush.msra.mxu0 0.0
        %1449 = vmatpush.msra.mxu0 0.0
        %1450 = vmatpush.msra.mxu0 0.0
        %1451 = vmatpush.msra.mxu0 0.0
        %1452 = vmatpush.msra.mxu0 0.0
        %1453 = vmatpush.msra.mxu0 0.0
        %v1454 = vand.u32 %v275, 4294901760
        %1455 = vmatpush.msra.mxu0 %v1454
        %v1456 = vand.u32 %v273, 4294901760
        %1457 = vmatpush.msra.mxu0 %v1456
        %v1458 = vand.u32 %v271, 4294901760
        %1459 = vmatpush.msra.mxu0 %v1458
        %v1460 = vand.u32 %v269, 4294901760
        %1461 = vmatpush.msra.mxu0 %v1460
        %v1462 = vand.u32 %v390, 4294901760
        %v1463 = vsub.f32 %v390, %v1462
        %v1464 = vand.u32 %v1463, 4294901760
        %1465 = vmatmul.f32.gmra.mxu0 %v1464
        %v1466 = vpop.f32.mrf.mxu0
        %v1467 = vadd.f32 %v1365, %v1466
        %v1468 = vand.u32 %v393, 4294901760
        %v1469 = vsub.f32 %v393, %v1468
        %v1470 = vand.u32 %v1469, 4294901760
        %1471 = vmatmul.f32.gmra.mxu0 %v1470
        %v1472 = vpop.f32.mrf.mxu0
        %v1473 = vadd.f32 %v1370, %v1472
        %v1474 = vand.u32 %v396, 4294901760
        %v1475 = vsub.f32 %v396, %v1474
        %v1476 = vand.u32 %v1475, 4294901760
        %1477 = vmatmul.f32.gmra.mxu0 %v1476
        %v1478 = vpop.f32.mrf.mxu0
        %v1479 = vadd.f32 %v1375, %v1478
        %v1480 = vand.u32 %v399, 4294901760
        %v1481 = vsub.f32 %v399, %v1480
        %v1482 = vand.u32 %v1481, 4294901760
        %1483 = vmatmul.f32.gmra.mxu0 %v1482
        %v1484 = vpop.f32.mrf.mxu0
        %v1485 = vadd.f32 %v1380, %v1484
        %v1486 = vand.u32 %v402, 4294901760
        %v1487 = vsub.f32 %v402, %v1486
        %v1488 = vand.u32 %v1487, 4294901760
        %1489 = vmatmul.f32.gmra.mxu0 %v1488
        %v1490 = vpop.f32.mrf.mxu0
        %v1491 = vadd.f32 %v1385, %v1490
        %v1492 = vand.u32 %v405, 4294901760
        %v1493 = vsub.f32 %v405, %v1492
        %v1494 = vand.u32 %v1493, 4294901760
        %1495 = vmatmul.f32.gmra.mxu0 %v1494
        %v1496 = vpop.f32.mrf.mxu0
        %v1497 = vadd.f32 %v1390, %v1496
        %v1498 = vand.u32 %v408, 4294901760
        %v1499 = vsub.f32 %v408, %v1498
        %v1500 = vand.u32 %v1499, 4294901760
        %1501 = vmatmul.f32.gmra.mxu0 %v1500
        %v1502 = vpop.f32.mrf.mxu0
        %v1503 = vadd.f32 %v1395, %v1502
        %v1504 = vand.u32 %v411, 4294901760
        %v1505 = vsub.f32 %v411, %v1504
        %v1506 = vand.u32 %v1505, 4294901760
        %1507 = vmatmul.f32.gmra.mxu0 %v1506
        %v1508 = vpop.f32.mrf.mxu0
        %v1509 = vadd.f32 %v1400, %v1508
        %v1510 = vand.u32 %v414, 4294901760
        %v1511 = vsub.f32 %v414, %v1510
        %v1512 = vand.u32 %v1511, 4294901760
        %1513 = vmatmul.f32.gmra.mxu0 %v1512
        %v1514 = vpop.f32.mrf.mxu0
        %v1515 = vadd.f32 %v1405, %v1514
        %v1516 = vand.u32 %v417, 4294901760
        %v1517 = vsub.f32 %v417, %v1516
        %v1518 = vand.u32 %v1517, 4294901760
        %1519 = vmatmul.f32.gmra.mxu0 %v1518
        %v1520 = vpop.f32.mrf.mxu0
        %v1521 = vadd.f32 %v1410, %v1520
        %v1522 = vand.u32 %v420, 4294901760
        %v1523 = vsub.f32 %v420, %v1522
        %v1524 = vand.u32 %v1523, 4294901760
        %1525 = vmatmul.f32.gmra.mxu0 %v1524
        %v1526 = vpop.f32.mrf.mxu0
        %v1527 = vadd.f32 %v1415, %v1526
        %v1528 = vand.u32 %v423, 4294901760
        %v1529 = vsub.f32 %v423, %v1528
        %v1530 = vand.u32 %v1529, 4294901760
        %1531 = vmatmul.f32.gmra.mxu0 %v1530
        %v1532 = vpop.f32.mrf.mxu0
        %v1533 = vadd.f32 %v1420, %v1532
        %v1534 = vand.u32 %v426, 4294901760
        %v1535 = vsub.f32 %v426, %v1534
        %v1536 = vand.u32 %v1535, 4294901760
        %1537 = vmatmul.f32.gmra.mxu0 %v1536
        %v1538 = vpop.f32.mrf.mxu0
        %v1539 = vadd.f32 %v1425, %v1538
        %v1540 = vand.u32 %v429, 4294901760
        %v1541 = vsub.f32 %v429, %v1540
        %v1542 = vand.u32 %v1541, 4294901760
        %1543 = vmatmul.f32.gmra.mxu0 %v1542
        %v1544 = vpop.f32.mrf.mxu0
        %v1545 = vadd.f32 %v1430, %v1544
        %v1546 = vand.u32 %v432, 4294901760
        %v1547 = vsub.f32 %v432, %v1546
        %v1548 = vand.u32 %v1547, 4294901760
        %1549 = vmatmul.f32.gmra.mxu0 %v1548
        %v1550 = vpop.f32.mrf.mxu0
        %v1551 = vadd.f32 %v1435, %v1550
        %v1552 = vand.u32 %v435, 4294901760
        %v1553 = vsub.f32 %v435, %v1552
        %v1554 = vand.u32 %v1553, 4294901760
        %1555 = vmatmul.f32.gmra.mxu0 %v1554
        %v1556 = vpop.f32.mrf.mxu0
        %v1557 = vadd.f32 %v1440, %v1556
        %1558 = vdwg.mxu0
        %1559 = vmatpush.msra.mxu0 0.0
        %1560 = vmatpush.msra.mxu0 0.0
        %1561 = vmatpush.msra.mxu0 0.0
        %1562 = vmatpush.msra.mxu0 0.0
        %1563 = vmatpush.msra.mxu0 0.0
        %1564 = vmatpush.msra.mxu0 0.0
        %1565 = vmatpush.msra.mxu0 0.0
        %1566 = vmatpush.msra.mxu0 0.0
        %1567 = vmatpush.msra.mxu0 0.0
        %1568 = vmatpush.msra.mxu0 0.0
        %1569 = vmatpush.msra.mxu0 0.0
        %1570 = vmatpush.msra.mxu0 0.0
        %v1571 = vand.u32 %v275, 4294901760
        %v1572 = vsub.f32 %v275, %v1571
        %v1573 = vand.u32 %v1572, 4294901760
        %1574 = vmatpush.msra.mxu0 %v1573
        %v1575 = vand.u32 %v273, 4294901760
        %v1576 = vsub.f32 %v273, %v1575
        %v1577 = vand.u32 %v1576, 4294901760
        %1578 = vmatpush.msra.mxu0 %v1577
        %v1579 = vand.u32 %v271, 4294901760
        %v1580 = vsub.f32 %v271, %v1579
        %v1581 = vand.u32 %v1580, 4294901760
        %1582 = vmatpush.msra.mxu0 %v1581
        %v1583 = vand.u32 %v269, 4294901760
        %v1584 = vsub.f32 %v269, %v1583
        %v1585 = vand.u32 %v1584, 4294901760
        %1586 = vmatpush.msra.mxu0 %v1585
        %v1587 = vand.u32 %v390, 4294901760
        %1588 = vmatmul.f32.gmra.mxu0 %v1587
        %v1589 = vpop.f32.mrf.mxu0
        %v1590 = vadd.f32 %v1467, %v1589
        %v1591 = vand.u32 %v393, 4294901760
        %1592 = vmatmul.f32.gmra.mxu0 %v1591
        %v1593 = vpop.f32.mrf.mxu0
        %v1594 = vadd.f32 %v1473, %v1593
        %v1595 = vand.u32 %v396, 4294901760
        %1596 = vmatmul.f32.gmra.mxu0 %v1595
        %v1597 = vpop.f32.mrf.mxu0
        %v1598 = vadd.f32 %v1479, %v1597
        %v1599 = vand.u32 %v399, 4294901760
        %1600 = vmatmul.f32.gmra.mxu0 %v1599
        %v1601 = vpop.f32.mrf.mxu0
        %v1602 = vadd.f32 %v1485, %v1601
        %v1603 = vand.u32 %v402, 4294901760
        %1604 = vmatmul.f32.gmra.mxu0 %v1603
        %v1605 = vpop.f32.mrf.mxu0
        %v1606 = vadd.f32 %v1491, %v1605
        %v1607 = vand.u32 %v405, 4294901760
        %1608 = vmatmul.f32.gmra.mxu0 %v1607
        %v1609 = vpop.f32.mrf.mxu0
        %v1610 = vadd.f32 %v1497, %v1609
        %v1611 = vand.u32 %v408, 4294901760
        %1612 = vmatmul.f32.gmra.mxu0 %v1611
        %v1613 = vpop.f32.mrf.mxu0
        %v1614 = vadd.f32 %v1503, %v1613
        %v1615 = vand.u32 %v411, 4294901760
        %1616 = vmatmul.f32.gmra.mxu0 %v1615
        %v1617 = vpop.f32.mrf.mxu0
        %v1618 = vadd.f32 %v1509, %v1617
        %v1619 = vand.u32 %v414, 4294901760
        %1620 = vmatmul.f32.gmra.mxu0 %v1619
        %v1621 = vpop.f32.mrf.mxu0
        %v1622 = vadd.f32 %v1515, %v1621
        %v1623 = vand.u32 %v417, 4294901760
        %1624 = vmatmul.f32.gmra.mxu0 %v1623
        %v1625 = vpop.f32.mrf.mxu0
        %v1626 = vadd.f32 %v1521, %v1625
        %v1627 = vand.u32 %v420, 4294901760
        %1628 = vmatmul.f32.gmra.mxu0 %v1627
        %v1629 = vpop.f32.mrf.mxu0
        %v1630 = vadd.f32 %v1527, %v1629
        %v1631 = vand.u32 %v423, 4294901760
        %1632 = vmatmul.f32.gmra.mxu0 %v1631
        %v1633 = vpop.f32.mrf.mxu0
        %v1634 = vadd.f32 %v1533, %v1633
        %v1635 = vand.u32 %v426, 4294901760
        %1636 = vmatmul.f32.gmra.mxu0 %v1635
        %v1637 = vpop.f32.mrf.mxu0
        %v1638 = vadd.f32 %v1539, %v1637
        %v1639 = vand.u32 %v429, 4294901760
        %1640 = vmatmul.f32.gmra.mxu0 %v1639
        %v1641 = vpop.f32.mrf.mxu0
        %v1642 = vadd.f32 %v1545, %v1641
        %v1643 = vand.u32 %v432, 4294901760
        %1644 = vmatmul.f32.gmra.mxu0 %v1643
        %v1645 = vpop.f32.mrf.mxu0
        %v1646 = vadd.f32 %v1551, %v1645
        %v1647 = vand.u32 %v435, 4294901760
        %1648 = vmatmul.f32.gmra.mxu0 %v1647
        %v1649 = vpop.f32.mrf.mxu0
        %v1650 = vadd.f32 %v1557, %v1649
        %1651 = vdwg.mxu0
        %1652 = vmatpush.msra.mxu0 0.0
        %1653 = vmatpush.msra.mxu0 0.0
        %1654 = vmatpush.msra.mxu0 0.0
        %1655 = vmatpush.msra.mxu0 0.0
        %1656 = vmatpush.msra.mxu0 0.0
        %1657 = vmatpush.msra.mxu0 0.0
        %1658 = vmatpush.msra.mxu0 0.0
        %1659 = vmatpush.msra.mxu0 0.0
        %1660 = vmatpush.msra.mxu0 0.0
        %1661 = vmatpush.msra.mxu0 0.0
        %1662 = vmatpush.msra.mxu0 0.0
        %1663 = vmatpush.msra.mxu0 0.0
        %v1664 = vand.u32 %v275, 4294901760
        %1665 = vmatpush.msra.mxu0 %v1664
        %v1666 = vand.u32 %v273, 4294901760
        %1667 = vmatpush.msra.mxu0 %v1666
        %v1668 = vand.u32 %v271, 4294901760
        %1669 = vmatpush.msra.mxu0 %v1668
        %v1670 = vand.u32 %v269, 4294901760
        %1671 = vmatpush.msra.mxu0 %v1670
        %v1672 = vand.u32 %v390, 4294901760
        %1673 = vmatmul.f32.gmra.mxu0 %v1672
        %v1674 = vpop.f32.mrf.mxu0
        %v1675 = vadd.f32 %v1590, %v1674
        %v1676 = vand.u32 %v393, 4294901760
        %1677 = vmatmul.f32.gmra.mxu0 %v1676
        %v1678 = vpop.f32.mrf.mxu0
        %v1679 = vadd.f32 %v1594, %v1678
        %v1680 = vand.u32 %v396, 4294901760
        %1681 = vmatmul.f32.gmra.mxu0 %v1680
        %v1682 = vpop.f32.mrf.mxu0
        %v1683 = vadd.f32 %v1598, %v1682
        %v1684 = vand.u32 %v399, 4294901760
        %1685 = vmatmul.f32.gmra.mxu0 %v1684
        %v1686 = vpop.f32.mrf.mxu0
        %v1687 = vadd.f32 %v1602, %v1686
        %v1688 = vand.u32 %v402, 4294901760
        %1689 = vmatmul.f32.gmra.mxu0 %v1688
        %v1690 = vpop.f32.mrf.mxu0
        %v1691 = vadd.f32 %v1606, %v1690
        %v1692 = vand.u32 %v405, 4294901760
        %1693 = vmatmul.f32.gmra.mxu0 %v1692
        %v1694 = vpop.f32.mrf.mxu0
        %v1695 = vadd.f32 %v1610, %v1694
        %v1696 = vand.u32 %v408, 4294901760
        %1697 = vmatmul.f32.gmra.mxu0 %v1696
        %v1698 = vpop.f32.mrf.mxu0
        %v1699 = vadd.f32 %v1614, %v1698
        %v1700 = vand.u32 %v411, 4294901760
        %1701 = vmatmul.f32.gmra.mxu0 %v1700
        %v1702 = vpop.f32.mrf.mxu0
        %v1703 = vadd.f32 %v1618, %v1702
        %v1704 = vand.u32 %v414, 4294901760
        %1705 = vmatmul.f32.gmra.mxu0 %v1704
        %v1706 = vpop.f32.mrf.mxu0
        %v1707 = vadd.f32 %v1622, %v1706
        %v1708 = vand.u32 %v417, 4294901760
        %1709 = vmatmul.f32.gmra.mxu0 %v1708
        %v1710 = vpop.f32.mrf.mxu0
        %v1711 = vadd.f32 %v1626, %v1710
        %v1712 = vand.u32 %v420, 4294901760
        %1713 = vmatmul.f32.gmra.mxu0 %v1712
        %v1714 = vpop.f32.mrf.mxu0
        %v1715 = vadd.f32 %v1630, %v1714
        %v1716 = vand.u32 %v423, 4294901760
        %1717 = vmatmul.f32.gmra.mxu0 %v1716
        %v1718 = vpop.f32.mrf.mxu0
        %v1719 = vadd.f32 %v1634, %v1718
        %v1720 = vand.u32 %v426, 4294901760
        %1721 = vmatmul.f32.gmra.mxu0 %v1720
        %v1722 = vpop.f32.mrf.mxu0
        %v1723 = vadd.f32 %v1638, %v1722
        %v1724 = vand.u32 %v429, 4294901760
        %1725 = vmatmul.f32.gmra.mxu0 %v1724
        %v1726 = vpop.f32.mrf.mxu0
        %v1727 = vadd.f32 %v1642, %v1726
        %v1728 = vand.u32 %v432, 4294901760
        %1729 = vmatmul.f32.gmra.mxu0 %v1728
        %v1730 = vpop.f32.mrf.mxu0
        %v1731 = vadd.f32 %v1646, %v1730
        %v1732 = vand.u32 %v435, 4294901760
        %1733 = vmatmul.f32.gmra.mxu0 %v1732
        %v1734 = vpop.f32.mrf.mxu0
        %v1735 = vadd.f32 %v1650, %v1734
        %1736 = vdwg.mxu0
        %v1737 = vlaneseq
        %v1738 = vshrl.u32 %v1737, 7
        %v1739 = vadd.s32 %v1738, 8
        %v1740 = vadd.s32 %v1738, 16
        %v1741 = vadd.s32 %v1738, 24
        %v1742 = vadd.s32 %v1738, 32
        %v1743 = vadd.s32 %v1738, 40
        %v1744 = vadd.s32 %v1738, 48
        %v1745 = vadd.s32 %v1738, 56
        %v1746 = vadd.s32 %v1738, 64
        %v1747 = vadd.s32 %v1738, 72
        %v1748 = vadd.s32 %v1738, 80
        %v1749 = vadd.s32 %v1738, 88
        %v1750 = vadd.s32 %v1738, 96
        %v1751 = vadd.s32 %v1738, 104
        %v1752 = vadd.s32 %v1738, 112
        %v1753 = vadd.s32 %v1738, 120
        %v1754 = vmax.f32 %v1025, %v1033
        %v1755 = vmax.f32 %v1029, %v1037
        %v1756 = vmax.f32 %v1754, %v1041
        %v1757 = vmax.f32 %v1755, %v1045
        %v1758 = vmax.f32 %v1756, %v1049
        %v1759 = vmax.f32 %v1757, %v1053
        %v1760 = vmax.f32 %v1758, %v1057
        %v1761 = vmax.f32 %v1759, %v1061
        %v1762 = vmax.f32 %v1760, %v1065
        %v1763 = vmax.f32 %v1761, %v1069
        %v1764 = vmax.f32 %v1762, %v1073
        %v1765 = vmax.f32 %v1763, %v1077
        %v1766 = vmax.f32 %v1764, %v1081
        %v1767 = vmax.f32 %v1765, %v1085
        %v1768 = vmax.f32 %v1766, %v1767
        %v1769 = vrot.slane %v1768, 4
        %v1770 = vmax.f32 %v1768, %v1769
        %v1771 = vrot.slane %v1770, 2
        %v1772 = vmax.f32 %v1770, %v1771
        %v1773 = vrot.slane %v1772, 1
        %v1774 = vmax.f32 %v1772, %v1773
        %v1775 = vmax.f32 %v1675, %v1683
        %v1776 = vmax.f32 %v1679, %v1687
        %v1777 = vmax.f32 %v1775, %v1691
        %v1778 = vmax.f32 %v1776, %v1695
        %v1779 = vmax.f32 %v1777, %v1699
        %v1780 = vmax.f32 %v1778, %v1703
        %v1781 = vmax.f32 %v1779, %v1707
        %v1782 = vmax.f32 %v1780, %v1711
        %v1783 = vmax.f32 %v1781, %v1715
        %v1784 = vmax.f32 %v1782, %v1719
        %v1785 = vmax.f32 %v1783, %v1723
        %v1786 = vmax.f32 %v1784, %v1727
        %v1787 = vmax.f32 %v1785, %v1731
        %v1788 = vmax.f32 %v1786, %v1735
        %v1789 = vmax.f32 %v1787, %v1788
        %v1790 = vrot.slane %v1789, 4
        %v1791 = vmax.f32 %v1789, %v1790
        %v1792 = vrot.slane %v1791, 2
        %v1793 = vmax.f32 %v1791, %v1792
        %v1794 = vrot.slane %v1793, 1
        %v1795 = vmax.f32 %v1793, %v1794
        %vm1796 = vcmp.eq.f32.partialorder %v1025, %v1774
        %vm1797 = vcmp.eq.f32.partialorder %v1675, %v1795
        %vm1798 = vcmp.eq.f32.partialorder %v1029, %v1774
        %vm1799 = vcmp.eq.f32.partialorder %v1679, %v1795
        %vm1800 = vcmp.eq.f32.partialorder %v1033, %v1774
        %vm1801 = vcmp.eq.f32.partialorder %v1683, %v1795
        %vm1802 = vcmp.eq.f32.partialorder %v1037, %v1774
        %vm1803 = vcmp.eq.f32.partialorder %v1687, %v1795
        %vm1804 = vcmp.eq.f32.partialorder %v1041, %v1774
        %vm1805 = vcmp.eq.f32.partialorder %v1691, %v1795
        %vm1806 = vcmp.eq.f32.partialorder %v1045, %v1774
        %vm1807 = vcmp.eq.f32.partialorder %v1695, %v1795
        %vm1808 = vcmp.eq.f32.partialorder %v1049, %v1774
        %vm1809 = vcmp.eq.f32.partialorder %v1699, %v1795
        %vm1810 = vcmp.eq.f32.partialorder %v1053, %v1774
        %vm1811 = vcmp.eq.f32.partialorder %v1703, %v1795
        %vm1812 = vcmp.eq.f32.partialorder %v1057, %v1774
        %vm1813 = vcmp.eq.f32.partialorder %v1707, %v1795
        %vm1814 = vcmp.eq.f32.partialorder %v1061, %v1774
        %vm1815 = vcmp.eq.f32.partialorder %v1711, %v1795
        %vm1816 = vcmp.eq.f32.partialorder %v1065, %v1774
        %vm1817 = vcmp.eq.f32.partialorder %v1715, %v1795
        %vm1818 = vcmp.eq.f32.partialorder %v1069, %v1774
        %vm1819 = vcmp.eq.f32.partialorder %v1719, %v1795
        %vm1820 = vcmp.eq.f32.partialorder %v1073, %v1774
        %vm1821 = vcmp.eq.f32.partialorder %v1723, %v1795
        %vm1822 = vcmp.eq.f32.partialorder %v1077, %v1774
        %vm1823 = vcmp.eq.f32.partialorder %v1727, %v1795
        %vm1824 = vcmp.eq.f32.partialorder %v1081, %v1774
        %vm1825 = vcmp.eq.f32.partialorder %v1731, %v1795
        %vm1826 = vcmp.eq.f32.partialorder %v1085, %v1774
        %vm1827 = vcmp.eq.f32.partialorder %v1735, %v1795
        %v1828 = vsel %vm1796, %v1738, 128
        %v1829 = vsel %vm1797, %v1738, 128
        %v1830 = vsel %vm1798, %v1739, 128
        %v1831 = vsel %vm1799, %v1739, 128
        %v1832 = vsel %vm1800, %v1740, 128
        %v1833 = vsel %vm1801, %v1740, 128
        %v1834 = vsel %vm1802, %v1741, 128
        %v1835 = vsel %vm1803, %v1741, 128
        %v1836 = vsel %vm1804, %v1742, 128
        %v1837 = vsel %vm1805, %v1742, 128
        %v1838 = vsel %vm1806, %v1743, 128
        %v1839 = vsel %vm1807, %v1743, 128
        %v1840 = vsel %vm1808, %v1744, 128
        %v1841 = vsel %vm1809, %v1744, 128
        %v1842 = vsel %vm1810, %v1745, 128
        %v1843 = vsel %vm1811, %v1745, 128
        %v1844 = vsel %vm1812, %v1746, 128
        %v1845 = vsel %vm1813, %v1746, 128
        %v1846 = vsel %vm1814, %v1747, 128
        %v1847 = vsel %vm1815, %v1747, 128
        %v1848 = vsel %vm1816, %v1748, 128
        %v1849 = vsel %vm1817, %v1748, 128
        %v1850 = vsel %vm1818, %v1749, 128
        %v1851 = vsel %vm1819, %v1749, 128
        %v1852 = vsel %vm1820, %v1750, 128
        %v1853 = vsel %vm1821, %v1750, 128
        %v1854 = vsel %vm1822, %v1751, 128
        %v1855 = vsel %vm1823, %v1751, 128
        %v1856 = vsel %vm1824, %v1752, 128
        %v1857 = vsel %vm1825, %v1752, 128
        %v1858 = vsel %vm1826, %v1753, 128
        %v1859 = vsel %vm1827, %v1753, 128
        %vm1860 = vcmp.lt.s32.totalorder %v1828, %v1832
        %v1861 = vsel %vm1860, %v1828, %v1832
        %vm1862 = vcmp.lt.s32.totalorder %v1830, %v1834
        %v1863 = vsel %vm1862, %v1830, %v1834
        %vm1864 = vcmp.lt.s32.totalorder %v1861, %v1836
        %v1865 = vsel %vm1864, %v1861, %v1836
        %vm1866 = vcmp.lt.s32.totalorder %v1863, %v1838
        %v1867 = vsel %vm1866, %v1863, %v1838
        %vm1868 = vcmp.lt.s32.totalorder %v1865, %v1840
        %v1869 = vsel %vm1868, %v1865, %v1840
        %vm1870 = vcmp.lt.s32.totalorder %v1867, %v1842
        %v1871 = vsel %vm1870, %v1867, %v1842
        %vm1872 = vcmp.lt.s32.totalorder %v1869, %v1844
        %v1873 = vsel %vm1872, %v1869, %v1844
        %vm1874 = vcmp.lt.s32.totalorder %v1871, %v1846
        %v1875 = vsel %vm1874, %v1871, %v1846
        %vm1876 = vcmp.lt.s32.totalorder %v1873, %v1848
        %v1877 = vsel %vm1876, %v1873, %v1848
        %vm1878 = vcmp.lt.s32.totalorder %v1875, %v1850
        %v1879 = vsel %vm1878, %v1875, %v1850
        %vm1880 = vcmp.lt.s32.totalorder %v1877, %v1852
        %v1881 = vsel %vm1880, %v1877, %v1852
        %vm1882 = vcmp.lt.s32.totalorder %v1879, %v1854
        %v1883 = vsel %vm1882, %v1879, %v1854
        %vm1884 = vcmp.lt.s32.totalorder %v1881, %v1856
        %v1885 = vsel %vm1884, %v1881, %v1856
        %vm1886 = vcmp.lt.s32.totalorder %v1883, %v1858
        %v1887 = vsel %vm1886, %v1883, %v1858
        %vm1888 = vcmp.lt.s32.totalorder %v1885, %v1887
        %v1889 = vsel %vm1888, %v1885, %v1887
        %v1890 = vrot.slane %v1889, 4
        %vm1891 = vcmp.lt.s32.totalorder %v1889, %v1890
        %v1892 = vsel %vm1891, %v1889, %v1890
        %v1893 = vrot.slane %v1892, 2
        %vm1894 = vcmp.lt.s32.totalorder %v1892, %v1893
        %v1895 = vsel %vm1894, %v1892, %v1893
        %v1896 = vrot.slane %v1895, 1
        %vm1897 = vcmp.lt.s32.totalorder %v1895, %v1896
        %v1898 = vsel %vm1897, %v1895, %v1896
        %vm1899 = vcmp.lt.s32.totalorder %v1829, %v1833
        %v1900 = vsel %vm1899, %v1829, %v1833
        %vm1901 = vcmp.lt.s32.totalorder %v1831, %v1835
        %v1902 = vsel %vm1901, %v1831, %v1835
        %vm1903 = vcmp.lt.s32.totalorder %v1900, %v1837
        %v1904 = vsel %vm1903, %v1900, %v1837
        %vm1905 = vcmp.lt.s32.totalorder %v1902, %v1839
        %v1906 = vsel %vm1905, %v1902, %v1839
        %vm1907 = vcmp.lt.s32.totalorder %v1904, %v1841
        %v1908 = vsel %vm1907, %v1904, %v1841
        %vm1909 = vcmp.lt.s32.totalorder %v1906, %v1843
        %v1910 = vsel %vm1909, %v1906, %v1843
        %vm1911 = vcmp.lt.s32.totalorder %v1908, %v1845
        %v1912 = vsel %vm1911, %v1908, %v1845
        %vm1913 = vcmp.lt.s32.totalorder %v1910, %v1847
        %v1914 = vsel %vm1913, %v1910, %v1847
        %vm1915 = vcmp.lt.s32.totalorder %v1912, %v1849
        %v1916 = vsel %vm1915, %v1912, %v1849
        %vm1917 = vcmp.lt.s32.totalorder %v1914, %v1851
        %v1918 = vsel %vm1917, %v1914, %v1851
        %vm1919 = vcmp.lt.s32.totalorder %v1916, %v1853
        %v1920 = vsel %vm1919, %v1916, %v1853
        %vm1921 = vcmp.lt.s32.totalorder %v1918, %v1855
        %v1922 = vsel %vm1921, %v1918, %v1855
        %vm1923 = vcmp.lt.s32.totalorder %v1920, %v1857
        %v1924 = vsel %vm1923, %v1920, %v1857
        %vm1925 = vcmp.lt.s32.totalorder %v1922, %v1859
        %v1926 = vsel %vm1925, %v1922, %v1859
        %vm1927 = vcmp.lt.s32.totalorder %v1924, %v1926
        %v1928 = vsel %vm1927, %v1924, %v1926
        %v1929 = vrot.slane %v1928, 4
        %vm1930 = vcmp.lt.s32.totalorder %v1928, %v1929
        %v1931 = vsel %vm1930, %v1928, %v1929
        %v1932 = vrot.slane %v1931, 2
        %vm1933 = vcmp.lt.s32.totalorder %v1931, %v1932
        %v1934 = vsel %vm1933, %v1931, %v1932
        %v1935 = vrot.slane %v1934, 1
        %vm1936 = vcmp.lt.s32.totalorder %v1934, %v1935
        %v1937 = vsel %vm1936, %v1934, %v1935
        %vm1938 = vcmp.lt.s32.totalorder %v1898, 127
        %v1939 = vsel %vm1938, %v1898, 127
        %vm1940 = vcmp.lt.s32.totalorder %v1937, 127
        %v1941 = vsel %vm1940, %v1937, 127
        %v1942 = vrot.slane %v1941, 7
        %vm1943 = vcmask 1040384
        %v1944 = vsel %vm1943, %v1939, %v1942
        %v1945 = vlaneseq
        %vm1946 = vcmp.ge.s32.totalorder %v1945, 0
        %vm1947 = vcmp.lt.s32.totalorder %v1945, 256
        %vm1948 = vmand %vm1946, %vm1947
        %1949 = vst.msk [vmem:[%s255] sm:$0x3] %vm1948, %v1944
        %vm1950 = vcmp.eq.s32.totalorder %v1738, %v1939
        %vm1951 = vcmp.eq.s32.totalorder %v1738, %v1941
        %vm1952 = vcmp.eq.s32.totalorder %v1739, %v1939
        %vm1953 = vcmp.eq.s32.totalorder %v1739, %v1941
        %vm1954 = vcmp.eq.s32.totalorder %v1740, %v1939
        %vm1955 = vcmp.eq.s32.totalorder %v1740, %v1941
        %vm1956 = vcmp.eq.s32.totalorder %v1741, %v1939
        %vm1957 = vcmp.eq.s32.totalorder %v1741, %v1941
        %vm1958 = vcmp.eq.s32.totalorder %v1742, %v1939
        %vm1959 = vcmp.eq.s32.totalorder %v1742, %v1941
        %vm1960 = vcmp.eq.s32.totalorder %v1743, %v1939
        %vm1961 = vcmp.eq.s32.totalorder %v1743, %v1941
        %vm1962 = vcmp.eq.s32.totalorder %v1744, %v1939
        %vm1963 = vcmp.eq.s32.totalorder %v1744, %v1941
        %vm1964 = vcmp.eq.s32.totalorder %v1745, %v1939
        %vm1965 = vcmp.eq.s32.totalorder %v1745, %v1941
        %vm1966 = vcmp.eq.s32.totalorder %v1746, %v1939
        %vm1967 = vcmp.eq.s32.totalorder %v1746, %v1941
        %vm1968 = vcmp.eq.s32.totalorder %v1747, %v1939
        %vm1969 = vcmp.eq.s32.totalorder %v1747, %v1941
        %vm1970 = vcmp.eq.s32.totalorder %v1748, %v1939
        %vm1971 = vcmp.eq.s32.totalorder %v1748, %v1941
        %vm1972 = vcmp.eq.s32.totalorder %v1749, %v1939
        %vm1973 = vcmp.eq.s32.totalorder %v1749, %v1941
        %vm1974 = vcmp.eq.s32.totalorder %v1750, %v1939
        %vm1975 = vcmp.eq.s32.totalorder %v1750, %v1941
        %vm1976 = vcmp.eq.s32.totalorder %v1751, %v1939
        %vm1977 = vcmp.eq.s32.totalorder %v1751, %v1941
        %vm1978 = vcmp.eq.s32.totalorder %v1752, %v1939
        %vm1979 = vcmp.eq.s32.totalorder %v1752, %v1941
        %vm1980 = vcmp.eq.s32.totalorder %v1753, %v1939
        %vm1981 = vcmp.eq.s32.totalorder %v1753, %v1941
        %v1982 = vsel %vm1950, 1, 0
        %v1983 = vsel %vm1951, 1, 0
        %v1984 = vsel %vm1952, 1, 0
        %v1985 = vsel %vm1953, 1, 0
        %v1986 = vsel %vm1954, 1, 0
        %v1987 = vsel %vm1955, 1, 0
        %v1988 = vsel %vm1956, 1, 0
        %v1989 = vsel %vm1957, 1, 0
        %v1990 = vsel %vm1958, 1, 0
        %v1991 = vsel %vm1959, 1, 0
        %v1992 = vsel %vm1960, 1, 0
        %v1993 = vsel %vm1961, 1, 0
        %v1994 = vsel %vm1962, 1, 0
        %v1995 = vsel %vm1963, 1, 0
        %v1996 = vsel %vm1964, 1, 0
        %v1997 = vsel %vm1965, 1, 0
        %v1998 = vsel %vm1966, 1, 0
        %v1999 = vsel %vm1967, 1, 0
        %v2000 = vsel %vm1968, 1, 0
        %v2001 = vsel %vm1969, 1, 0
        %v2002 = vsel %vm1970, 1, 0
        %v2003 = vsel %vm1971, 1, 0
        %v2004 = vsel %vm1972, 1, 0
        %v2005 = vsel %vm1973, 1, 0
        %v2006 = vsel %vm1974, 1, 0
        %v2007 = vsel %vm1975, 1, 0
        %v2008 = vsel %vm1976, 1, 0
        %v2009 = vsel %vm1977, 1, 0
        %v2010 = vsel %vm1978, 1, 0
        %v2011 = vsel %vm1979, 1, 0
        %v2012 = vsel %vm1980, 1, 0
        %v2013 = vsel %vm1981, 1, 0
        %v2014 = vcvt.s32.f32 %v1982
        %v2015 = vcvt.s32.f32 %v1983
        %v2016 = vcvt.s32.f32 %v1984
        %v2017 = vcvt.s32.f32 %v1985
        %v2018 = vcvt.s32.f32 %v1986
        %v2019 = vcvt.s32.f32 %v1987
        %v2020 = vcvt.s32.f32 %v1988
        %v2021 = vcvt.s32.f32 %v1989
        %v2022 = vcvt.s32.f32 %v1990
        %v2023 = vcvt.s32.f32 %v1991
        %v2024 = vcvt.s32.f32 %v1992
        %v2025 = vcvt.s32.f32 %v1993
        %v2026 = vcvt.s32.f32 %v1994
        %v2027 = vcvt.s32.f32 %v1995
        %v2028 = vcvt.s32.f32 %v1996
        %v2029 = vcvt.s32.f32 %v1997
        %v2030 = vcvt.s32.f32 %v1998
        %v2031 = vcvt.s32.f32 %v1999
        %v2032 = vcvt.s32.f32 %v2000
        %v2033 = vcvt.s32.f32 %v2001
        %v2034 = vcvt.s32.f32 %v2002
        %v2035 = vcvt.s32.f32 %v2003
        %v2036 = vcvt.s32.f32 %v2004
        %v2037 = vcvt.s32.f32 %v2005
        %v2038 = vcvt.s32.f32 %v2006
        %v2039 = vcvt.s32.f32 %v2007
        %v2040 = vcvt.s32.f32 %v2008
        %v2041 = vcvt.s32.f32 %v2009
        %v2042 = vcvt.s32.f32 %v2010
        %v2043 = vcvt.s32.f32 %v2011
        %v2044 = vcvt.s32.f32 %v2012
        %v2045 = vcvt.s32.f32 %v2013
        %v2046 = vpack.c.bf16 %v2016, %v2014
        %v2047 = vpack.c.bf16 %v2017, %v2015
        %v2048 = vpack.c.bf16 %v2020, %v2018
        %v2049 = vpack.c.bf16 %v2021, %v2019
        %v2050 = vpack.c.bf16 %v2024, %v2022
        %v2051 = vpack.c.bf16 %v2025, %v2023
        %v2052 = vpack.c.bf16 %v2028, %v2026
        %v2053 = vpack.c.bf16 %v2029, %v2027
        %v2054 = vpack.c.bf16 %v2032, %v2030
        %v2055 = vpack.c.bf16 %v2033, %v2031
        %v2056 = vpack.c.bf16 %v2036, %v2034
        %v2057 = vpack.c.bf16 %v2037, %v2035
        %v2058 = vpack.c.bf16 %v2040, %v2038
        %v2059 = vpack.c.bf16 %v2041, %v2039
        %v2060 = vpack.c.bf16 %v2044, %v2042
        %v2061 = vpack.c.bf16 %v2045, %v2043
        %v2062 = vld [vmem:[%s3] sm:$0xf]
        %v2063 = vld [vmem:[%s3 + $0x4] sm:$0xf]
        %v2064 = vld [vmem:[%s3 + $0x8] sm:$0xf]
        %v2065 = vld [vmem:[%s3 + $0xc] sm:$0xf]
        %v2070 = vunpack.c.l.b16 %v2062
        %v2071 = vunpack.c.l.b16 %v2063
        %v2072 = vunpack.c.l.b16 %v2064
        %v2073 = vunpack.c.l.b16 %v2065
        %v2074 = vpack.c.b16 %v2071, %v2070
        %v2075 = vpack.c.b16 %v2073, %v2072
        %2078 = vmatpush.bf16.msra.mxu0 %v2060
        %2079 = vmatpush.bf16.msra.mxu0 %v2058
        %2080 = vmatpush.bf16.msra.mxu0 %v2056
        %2081 = vmatpush.bf16.msra.mxu0 %v2054
        %2082 = vmatpush.bf16.msra.mxu0 %v2052
        %2083 = vmatpush.bf16.msra.mxu0 %v2050
        %2084 = vmatpush.bf16.msra.mxu0 %v2048
        %2085 = vmatpush.bf16.msra.mxu0 %v2046
        %2086 = vmatmul.bf16.gmra.mxu0 %v2074
        %v2087 = vpop.f32.mrf.mxu0
        %v2088 = vadd.f32 0.0, %v2087
        %v2089 = vpop.f32.mrf.mxu0
        %v2090 = vadd.f32 0.0, %v2089
        %2091 = vmatmul.bf16.gmra.mxu0 %v2075
        %v2092 = vpop.f32.mrf.mxu0
        %v2093 = vadd.f32 0.0, %v2092
        %v2094 = vpop.f32.mrf.mxu0
        %v2095 = vadd.f32 0.0, %v2094
        %2096 = vdwg.mxu0
        %2097 = vmatpush.bf16.msra.mxu0 %v2061
        %2098 = vmatpush.bf16.msra.mxu0 %v2059
        %2099 = vmatpush.bf16.msra.mxu0 %v2057
        %2100 = vmatpush.bf16.msra.mxu0 %v2055
        %2101 = vmatpush.bf16.msra.mxu0 %v2053
        %2102 = vmatpush.bf16.msra.mxu0 %v2051
        %2103 = vmatpush.bf16.msra.mxu0 %v2049
        %2104 = vmatpush.bf16.msra.mxu0 %v2047
        %2105 = vmatmul.bf16.gmra.mxu0 %v2074
        %v2106 = vpop.f32.mrf.mxu0
        %v2107 = vadd.f32 0.0, %v2106
        %v2108 = vpop.f32.mrf.mxu0
        %v2109 = vadd.f32 0.0, %v2108
        %2110 = vmatmul.bf16.gmra.mxu0 %v2075
        %v2111 = vpop.f32.mrf.mxu0
        %v2112 = vadd.f32 0.0, %v2111
        %v2113 = vpop.f32.mrf.mxu0
        %v2114 = vadd.f32 0.0, %v2113
        %2115 = vdwg.mxu0
        %2116 = vst [vmem:[%s248] sm:$0xff] %v2088
        %2117 = vst [vmem:[%s248 + $0x8] sm:$0xff] %v2107
        %2118 = vst [vmem:[%s248 + $0x10] sm:$0xff] %v2090
        %2119 = vst [vmem:[%s248 + $0x18] sm:$0xff] %v2109
        %2120 = vst [vmem:[%s248 + $0x20] sm:$0xff] %v2093
        %2121 = vst [vmem:[%s248 + $0x28] sm:$0xff] %v2112
        %2122 = vst [vmem:[%s248 + $0x30] sm:$0xff] %v2095
        %2123 = vst [vmem:[%s248 + $0x38] sm:$0xff] %v2114
        %s2124 = sand.u32 %s136, 1
        %s2125 = scalar_lea.sflag [#allocation3], %s2124
        %s2126 = sand.u32 %s136, 1
        %s2127 = smul.addr %s2126, 64
        %s2128 = scalar_lea.vmem [#allocation2], %s2127
        %s2129 = sand.u32 %s164, 1
        %s2130 = scalar_lea.sflag [#allocation5], %s2129
        %s2131 = sand.u32 %s164, 1
        %s2132 = smul.addr %s2131, 2
        %s2133 = scalar_lea.vmem [#allocation4], %s2132
        // Predicated region
        $region37: #{tpu_custom_call.1} parent=35 // pred_check
          %p2134 = pneg %p146
        $region38: #{tpu_custom_call.1} parent=35 // pred_check_branch
          %2136 = sbr.rel (%p2134) target = $region40
        $region39: #{tpu_custom_call.1} parent=35 // pred_region
          %s2137 = smul.u32 2, %s28
          %2139 = vsyncadd %s2125, 0
          %s2140 = smul.addr %s27, 8
          %s2141 = sadd.s32 %s2137, %s2140
          %s2142 = smul.addr %s2141, 8
          %s2143 = scalar_lea.hbm %s4, %s2142
          %s2144 = sshll.u32 %s2128, 4
          %s2145 = int_to_ptr.vmem [resolvable:$true] %s2144
          %s2146 = sshll.u32 %s2143, 4
          %s2147 = int_to_ptr.hbm [resolvable:$true] %s2146
          %2152 = dma.vmem_to_hbm [thread:$0]  %s2145, 1024, %s2147, %s2125, 256, 256, 16
        $region40: #{tpu_custom_call.1} parent=35 // pred_fallthru
          _
        // Predicated region
        $region41: #{tpu_custom_call.1} parent=35 // pred_check
          %p2153 = pneg %p174
        $region42: #{tpu_custom_call.1} parent=35 // pred_check_branch
          %2155 = sbr.rel (%p2153) target = $region44
        $region43: #{tpu_custom_call.1} parent=35 // pred_region
          %s2156 = smul.u32 2, %s28
          %2158 = vsyncadd %s2130, 0
          %s2159 = smul.addr %s27, 2
          %s2160 = sadd.s32 %s2156, %s2159
          %s2161 = scalar_lea.hbm %s5, %s2160
          %s2163 = sshll.u32 %s2133, 4
          %s2164 = int_to_ptr.vmem [resolvable:$true] %s2163
          %s2165 = sshll.u32 %s2161, 4
          %s2166 = int_to_ptr.hbm [resolvable:$true] %s2165
          %2168 = dma.vmem_to_hbm [thread:$0]  %s2164, 32, %s2166, %s2130
        $region44: #{tpu_custom_call.1} parent=35 // pred_fallthru
          _
      $region36: #{tpu_custom_call.1} parent=5 // pred_fallthru
        _
      %p2169 = scmp.le.s32.totalorder 2, %s18
      // Predicated region
      $region45: #{tpu_custom_call.1} parent=5 // pred_check
        %p2170 = pneg %p2169
      $region46: #{tpu_custom_call.1} parent=5 // pred_check_branch
        %2172 = sbr.rel (%p2170) target = $region48
      $region47: #{tpu_custom_call.1} parent=5 // pred_region
        %s2173 = ssub.s32 %s18, 2
        // Predicated region
        $region49: #{tpu_custom_call.1} parent=47 // pred_check
          %p2174 = pneg %p152
        $region50: #{tpu_custom_call.1} parent=47 // pred_check_branch
          %2176 = sbr.rel (%p2174) target = $region52
        $region51: #{tpu_custom_call.1} parent=47 // pred_region
          %s2177 = sand.u32 %s137, 1
          %s2178 = scalar_lea.sflag [#allocation3], %s2177
          %s2179 = sand.u32 %s137, 1
          %s2180 = smul.addr %s2179, 64
          %s2181 = scalar_lea.vmem [#allocation2], %s2180
          %2183 = dma.done %s2178, 1024
        $region52: #{tpu_custom_call.1} parent=47 // pred_fallthru
          _
        // Predicated region
        $region53: #{tpu_custom_call.1} parent=47 // pred_check
          %p2184 = pneg %p180
        $region54: #{tpu_custom_call.1} parent=47 // pred_check_branch
          %2186 = sbr.rel (%p2184) target = $region56
        $region55: #{tpu_custom_call.1} parent=47 // pred_region
          %s2187 = sand.u32 %s165, 1
          %s2188 = scalar_lea.sflag [#allocation5], %s2187
          %s2189 = sand.u32 %s165, 1
          %s2190 = smul.addr %s2189, 2
          %s2191 = scalar_lea.vmem [#allocation4], %s2190
          %2193 = dma.done %s2188, 32
        $region56: #{tpu_custom_call.1} parent=47 // pred_fallthru
          _
      $region48: #{tpu_custom_call.1} parent=5 // pred_fallthru
        _
    $region6: #{tpu_custom_call.1} parent=1 // loop_footer
      %s22 = sadd.s32 1, %s18
    $region7: #{tpu_custom_call.1} parent=1 // loop_footer_branch
      %17 = sbr.rel target = $region3
    $region8: #{tpu_custom_call.1} parent=1 // loop_exit
      _
    %2194 = vsyncpa [#allocation3], 1
    %s2195 = scalar_lea.sflag [#allocation3], 1
    %2196 = vsyncpa %s2195, 1
    %2197 = vsyncpa [#allocation5], 1
    %s2198 = scalar_lea.sflag [#allocation5], 1
    %2199 = vsyncpa %s2198, 1

</llo_original>
